<compile_context>
chip_gen: v7x
topology: tpu7x:2x2x1
jax: 0.10.0
libtpu: 0.0.40
codegen_flags: <defaults>
</compile_context>

<pallas_src>
import functools

import jax
import jax.numpy as jnp
from jax.experimental import pallas as pl
from jax.experimental.pallas import tpu as pltpu


def _round_up(x, m):
    return ((x + m - 1) // m) * m


def _vae_state_kernel(
    # inputs
    state_ref, eps_ref,
    w_e1, b_e1, w_e2, b_e2,
    w_ml, b_ml,                       # fused [mean | log_std] projection
    w_d1, b_d1, w_d2, b_d2, w_d3, b_d3,
    # output: packed [ u | mean | std ]
    out_ref,
    *, max_state, state_dim, latent_dim,
):
    f32 = jnp.float32
    bf16 = jnp.bfloat16

    x = state_ref[...]                                    # (bm, s) bf16

    # ---- encoder (bf16 inputs, f32 accumulation) ----
    h = jnp.dot(x, w_e1[...], preferred_element_type=f32) + b_e1[...]
    h = jnp.maximum(h, 0.0)
    h = jnp.dot(h.astype(bf16), w_e2[...], preferred_element_type=f32) + b_e2[...]
    h = jnp.maximum(h, 0.0)

    # fused mean / log_std projection: one MXU pass, 2*latent lanes wide
    ml = jnp.dot(h.astype(bf16), w_ml[...], preferred_element_type=f32) + b_ml[...]
    mean = ml[:, :latent_dim]                              # f32
    log_std = jnp.clip(ml[:, latent_dim:], -4.0, 15.0)     # .clamp(-4, 15)
    std = jnp.exp(log_std)                                 # f32, EUP

    # ---- reparameterize (kept in f32) ----
    z = mean + std * eps_ref[...]

    # ---- decoder ----
    s = jnp.dot(z.astype(bf16), w_d1[...], preferred_element_type=f32) + b_d1[...]
    s = jnp.maximum(s, 0.0)
    s = jnp.dot(s.astype(bf16), w_d2[...], preferred_element_type=f32) + b_d2[...]
    s = jnp.maximum(s, 0.0)
    u = jnp.dot(s.astype(bf16), w_d3[...], preferred_element_type=f32) + b_d3[...]
    if max_state is not None:
        u = max_state * jnp.tanh(u)

    # ---- single packed, denser output slab: [ u | mean | std ] ----
    out_ref[:, :state_dim] = u.astype(out_ref.dtype)
    out_ref[:, state_dim:state_dim + latent_dim] = mean.astype(out_ref.dtype)
    out_ref[:, state_dim + latent_dim:] = std.astype(out_ref.dtype)


def vae_state_forward(state, eps, params, *, max_state, block_batch=256):
    """Fused VAE_state.forward. Returns (u, mean, std), each f32."""
    B, state_dim = state.shape
    hidden_dim = params["w_e1"].shape[1]
    latent_dim = params["w_mu"].shape[1]

    # ---- batch tiling: big tile, but keep >= 2 grid steps when possible (v7x 2 TCs)
    bm = min(int(block_batch), _round_up(max((B + 1) // 2, 1), 16))
    bm = max(_round_up(bm, 16), 16)
    Bp = _round_up(B, bm)
    grid = (Bp // bm,)

    state_p = state
    eps_p = eps
    if Bp != B:
        pad = Bp - B
        state_p = jnp.pad(state, ((0, pad), (0, 0)))
        eps_p = jnp.pad(eps, ((0, pad), (0, 0)))

    # ---- bf16 weights/activations for MXU-native rate; biases stay f32 (1, n) rows
    bf16 = jnp.bfloat16
    state_p = state_p.astype(bf16)
    w_e1 = params["w_e1"].astype(bf16); b_e1 = params["b_e1"].reshape(1, -1)
    w_e2 = params["w_e2"].astype(bf16); b_e2 = params["b_e2"].reshape(1, -1)
    w_ml = jnp.concatenate([params["w_mu"], params["w_ls"]], axis=1).astype(bf16)
    b_ml = jnp.concatenate([params["b_mu"], params["b_ls"]]).reshape(1, -1)
    w_d1 = params["w_d1"].astype(bf16); b_d1 = params["b_d1"].reshape(1, -1)
    w_d2 = params["w_d2"].astype(bf16); b_d2 = params["b_d2"].reshape(1, -1)
    w_d3 = params["w_d3"].astype(bf16); b_d3 = params["b_d3"].reshape(1, -1)

    out_cols = state_dim + 2 * latent_dim

    def row_spec(cols):
        # per-grid-step batch tile
        return pl.BlockSpec((bm, cols), lambda i: (i, 0))

    def resident(r, c):
        # constant index map -> tensor DMA'd once, stays resident in VMEM
        return pl.BlockSpec((r, c), lambda i: (0, 0))

    in_specs = [
        row_spec(state_dim),                                   # state (bf16)
        row_spec(latent_dim),                                  # eps (f32)
        resident(state_dim, hidden_dim), resident(1, hidden_dim),        # e1
        resident(hidden_dim, hidden_dim), resident(1, hidden_dim),       # e2
        resident(hidden_dim, 2 * latent_dim), resident(1, 2 * latent_dim),  # mean|log_std
        resident(latent_dim, hidden_dim), resident(1, hidden_dim),       # d1
        resident(hidden_dim, hidden_dim), resident(1, hidden_dim),       # d2
        resident(hidden_dim, state_dim), resident(1, state_dim),         # d3
    ]
    out_specs = row_spec(out_cols)
    out_shape = jax.ShapeDtypeStruct((Bp, out_cols), jnp.float32)

    # ---- advisory cost estimate so XLA overlaps this small kernel properly
    s, h, l = state_dim, hidden_dim, latent_dim
    mac = s * h + h * h + h * (2 * l) + l * h + h * h + h * s
    weight_bytes = 2 * mac + 4 * (h + h + 2 * l + h + h + s)
    cost = pl.CostEstimate(
        flops=2 * Bp * mac,
        transcendentals=Bp * (l + s),                      # exp(latent) + tanh(state)
        bytes_accessed=(Bp * s * 2 + Bp * l * 4            # state (bf16) + eps (f32)
                        + weight_bytes                     # resident weights/biases
                        + Bp * out_cols * 4),              # packed output
    )

    kernel = functools.partial(
        _vae_state_kernel,
        max_state=max_state, state_dim=state_dim, latent_dim=latent_dim,
    )

    packed = pl.pallas_call(
        kernel,
        out_shape=out_shape,
        grid_spec=pltpu.PrefetchScalarGridSpec(
            num_scalar_prefetch=0,
            grid=grid,
            in_specs=in_specs,
            out_specs=out_specs,
        ),
        compiler_params=pltpu.CompilerParams(
            # Toy hidden_dim -> weights + double-buffered batch tiles fit the
            # default scoped VMEM easily on v5e/v6e/v7x; set vmem_limit_bytes
            # explicitly if hidden_dim grows large in production.
            dimension_semantics=("parallel",),
        ),
        cost_estimate=cost,
    )(
        state_p, eps_p,
        w_e1, b_e1, w_e2, b_e2,
        w_ml, b_ml,
        w_d1, b_d1, w_d2, b_d2, w_d3, b_d3,
    )

    packed = packed[:B]
    u = packed[:, :state_dim]
    mean = packed[:, state_dim:state_dim + latent_dim]
    std = packed[:, state_dim + latent_dim:]
    return u, mean, std


def init_params(key, state_dim, hidden_dim, latent_dim):
    """Deterministic init mimicking torch.nn.Linear (U(-1/sqrt(in), 1/sqrt(in)))."""
    def linear(k, fan_in, fan_out):
        kw, kb = jax.random.split(k)
        bound = 1.0 / jnp.sqrt(float(fan_in))
        w = jax.random.uniform(kw, (fan_in, fan_out), jnp.float32, -bound, bound)
        b = jax.random.uniform(kb, (fan_out,), jnp.float32, -bound, bound)
        return w, b

    keys = jax.random.split(key, 7)
    p = {}
    p["w_e1"], p["b_e1"] = linear(keys[0], state_dim, hidden_dim)
    p["w_e2"], p["b_e2"] = linear(keys[1], hidden_dim, hidden_dim)
    p["w_mu"], p["b_mu"] = linear(keys[2], hidden_dim, latent_dim)
    p["w_ls"], p["b_ls"] = linear(keys[3], hidden_dim, latent_dim)
    p["w_d1"], p["b_d1"] = linear(keys[4], latent_dim, hidden_dim)
    p["w_d2"], p["b_d2"] = linear(keys[5], hidden_dim, hidden_dim)
    p["w_d3"], p["b_d3"] = linear(keys[6], hidden_dim, state_dim)
    return p


def vae_state_forward_ref(state, eps, params, *, max_state,
                          compute_dtype=jnp.float32):
    """Pure-JAX reference. compute_dtype controls the matmul-input precision."""
    f32 = jnp.float32

    def lin(x, w, b):
        return jnp.dot(x.astype(compute_dtype), w.astype(compute_dtype),
                       preferred_element_type=f32) + b

    relu = lambda v: jnp.maximum(v, 0.0)
    h = relu(lin(state, params["w_e1"], params["b_e1"]))
    h = relu(lin(h, params["w_e2"], params["b_e2"]))
    mean = lin(h, params["w_mu"], params["b_mu"])
    log_std = jnp.clip(lin(h, params["w_ls"], params["b_ls"]), -4.0, 15.0)
    std = jnp.exp(log_std)
    z = mean + std * eps
    s = relu(lin(z, params["w_d1"], params["b_d1"]))
    s = relu(lin(s, params["w_d2"], params["b_d2"]))
    u = lin(s, params["w_d3"], params["b_d3"])
    if max_state is not None:
        u = max_state * jnp.tanh(u)
    return u, mean, std


if __name__ == "__main__":
    # Small feature dims consistent with the module's Linear stack; batch is
    # deliberately ragged (500) to exercise the padding path, and with
    # block_batch=256 the grid is (2,) -> both v7x TensorCores get a tile.
    B, STATE_DIM, HIDDEN_DIM, LATENT_DIM = 500, 16, 32, 8
    MAX_STATE = 1.0

    key = jax.random.PRNGKey(0)
    k_params, k_state, k_eps = jax.random.split(key, 3)

    params = init_params(k_params, STATE_DIM, HIDDEN_DIM, LATENT_DIM)
    state = jax.random.normal(k_state, (B, STATE_DIM), jnp.float32)
    # Noise for the reparameterization trick (torch.randn_like(std)).
    eps = jax.random.normal(k_eps, (B, LATENT_DIM), jnp.float32)

    fwd = jax.jit(functools.partial(vae_state_forward, max_state=MAX_STATE,
                                    block_batch=256))
    u, mean, std = fwd(state, eps, params)
    jax.block_until_ready((u, mean, std))

    # Tight check vs a reference with matching bf16 matmul inputs / f32 accumulation.
    u_m, mean_m, std_m = vae_state_forward_ref(
        state, eps, params, max_state=MAX_STATE, compute_dtype=jnp.bfloat16)
    assert jnp.allclose(u, u_m, atol=2e-3, rtol=2e-3)
    assert jnp.allclose(mean, mean_m, atol=2e-3, rtol=2e-3)
    assert jnp.allclose(std, std_m, atol=2e-3, rtol=2e-3)

    # Sanity check vs the full-f32 PyTorch-semantics reference (bf16 quantization tol).
    u_r, mean_r, std_r = vae_state_forward_ref(
        state, eps, params, max_state=MAX_STATE, compute_dtype=jnp.float32)
    assert jnp.allclose(u, u_r, atol=5e-2, rtol=5e-2)
    assert jnp.allclose(mean, mean_r, atol=5e-2, rtol=5e-2)
    assert jnp.allclose(std, std_r, atol=5e-2, rtol=5e-2)

    print("KERNEL_OK")
</pallas_src>

<mosaic_0001>
module attributes {stable_mosaic.version = 11 : i64} {
  func.func @_vae_state_kernel(%arg0: i32, %arg1: memref<256x16xbf16, #tpu.memory_space<vmem>>, %arg2: memref<256x8xf32, #tpu.memory_space<vmem>>, %arg3: memref<16x32xbf16, #tpu.memory_space<vmem>>, %arg4: memref<1x32xf32, #tpu.memory_space<vmem>>, %arg5: memref<32x32xbf16, #tpu.memory_space<vmem>>, %arg6: memref<1x32xf32, #tpu.memory_space<vmem>>, %arg7: memref<32x16xbf16, #tpu.memory_space<vmem>>, %arg8: memref<1x16xf32, #tpu.memory_space<vmem>>, %arg9: memref<8x32xbf16, #tpu.memory_space<vmem>>, %arg10: memref<1x32xf32, #tpu.memory_space<vmem>>, %arg11: memref<32x32xbf16, #tpu.memory_space<vmem>>, %arg12: memref<1x32xf32, #tpu.memory_space<vmem>>, %arg13: memref<32x16xbf16, #tpu.memory_space<vmem>>, %arg14: memref<1x16xf32, #tpu.memory_space<vmem>>, %arg15: memref<256x32xf32, #tpu.memory_space<vmem>>) attributes {dimension_semantics = [#tpu.dimension_semantics<parallel>], iteration_bounds = array<i64: 2>, scalar_prefetch = 0 : i64, scratch_operands = 0 : i64, tpu.core_type = #tpu.core_type<tc>, window_params = [{transform_indices = @transform_0, window_bounds = array<i64: 256, 16>}, {transform_indices = @transform_1, window_bounds = array<i64: 256, 8>}, {pipeline_mode = #tpu.pipeline_mode<synchronous>, transform_indices = @transform_2, window_bounds = array<i64: 16, 32>}, {pipeline_mode = #tpu.pipeline_mode<synchronous>, transform_indices = @transform_3, window_bounds = array<i64: 1, 32>}, {pipeline_mode = #tpu.pipeline_mode<synchronous>, transform_indices = @transform_4, window_bounds = array<i64: 32, 32>}, {pipeline_mode = #tpu.pipeline_mode<synchronous>, transform_indices = @transform_5, window_bounds = array<i64: 1, 32>}, {pipeline_mode = #tpu.pipeline_mode<synchronous>, transform_indices = @transform_6, window_bounds = array<i64: 32, 16>}, {pipeline_mode = #tpu.pipeline_mode<synchronous>, transform_indices = @transform_7, window_bounds = array<i64: 1, 16>}, {pipeline_mode = #tpu.pipeline_mode<synchronous>, transform_indices = @transform_8, window_bounds = array<i64: 8, 32>}, {pipeline_mode = #tpu.pipeline_mode<synchronous>, transform_indices = @transform_9, window_bounds = array<i64: 1, 32>}, {pipeline_mode = #tpu.pipeline_mode<synchronous>, transform_indices = @transform_10, window_bounds = array<i64: 32, 32>}, {pipeline_mode = #tpu.pipeline_mode<synchronous>, transform_indices = @transform_11, window_bounds = array<i64: 1, 32>}, {pipeline_mode = #tpu.pipeline_mode<synchronous>, transform_indices = @transform_12, window_bounds = array<i64: 32, 16>}, {pipeline_mode = #tpu.pipeline_mode<synchronous>, transform_indices = @transform_13, window_bounds = array<i64: 1, 16>}, {transform_indices = @transform_14, window_bounds = array<i64: 256, 32>}]} {
    %c0 = arith.constant 0 : index
    %c0_0 = arith.constant 0 : index
    %0 = vector.load %arg1[%c0, %c0_0] : memref<256x16xbf16, #tpu.memory_space<vmem>>, vector<256x16xbf16>
    %c0_1 = arith.constant 0 : index
    %c0_2 = arith.constant 0 : index
    %1 = vector.load %arg3[%c0_1, %c0_2] : memref<16x32xbf16, #tpu.memory_space<vmem>>, vector<16x32xbf16>
    %cst = arith.constant dense<0.000000e+00> : vector<256x32xf32>
    %2 = tpu.matmul %0, %1, %cst {dimension_numbers = #tpu.dot_dimension_numbers<[1], [0], [0], [1], [0, 0, 1, 1], [], []>} : vector<256x16xbf16>, vector<16x32xbf16>, vector<256x32xf32> -> vector<256x32xf32>
    %c0_3 = arith.constant 0 : index
    %c0_4 = arith.constant 0 : index
    %3 = vector.load %arg4[%c0_3, %c0_4] : memref<1x32xf32, #tpu.memory_space<vmem>>, vector<1x32xf32>
    %4 = vector.broadcast %3 : vector<1x32xf32> to vector<256x32xf32>
    %5 = arith.addf %2, %4 : vector<256x32xf32>
    %cst_5 = arith.constant 0.000000e+00 : f32
    %6 = vector.broadcast %cst_5 : f32 to vector<256x32xf32>
    %7 = arith.maximumf %5, %6 : vector<256x32xf32>
    %8 = arith.truncf %7 : vector<256x32xf32> to vector<256x32xbf16>
    %c0_6 = arith.constant 0 : index
    %c0_7 = arith.constant 0 : index
    %9 = vector.load %arg5[%c0_6, %c0_7] : memref<32x32xbf16, #tpu.memory_space<vmem>>, vector<32x32xbf16>
    %cst_8 = arith.constant dense<0.000000e+00> : vector<256x32xf32>
    %10 = tpu.matmul %8, %9, %cst_8 {dimension_numbers = #tpu.dot_dimension_numbers<[1], [0], [0], [1], [0, 0, 1, 1], [], []>} : vector<256x32xbf16>, vector<32x32xbf16>, vector<256x32xf32> -> vector<256x32xf32>
    %c0_9 = arith.constant 0 : index
    %c0_10 = arith.constant 0 : index
    %11 = vector.load %arg6[%c0_9, %c0_10] : memref<1x32xf32, #tpu.memory_space<vmem>>, vector<1x32xf32>
    %12 = vector.broadcast %11 : vector<1x32xf32> to vector<256x32xf32>
    %13 = arith.addf %10, %12 : vector<256x32xf32>
    %cst_11 = arith.constant 0.000000e+00 : f32
    %14 = vector.broadcast %cst_11 : f32 to vector<256x32xf32>
    %15 = arith.maximumf %13, %14 : vector<256x32xf32>
    %16 = arith.truncf %15 : vector<256x32xf32> to vector<256x32xbf16>
    %c0_12 = arith.constant 0 : index
    %c0_13 = arith.constant 0 : index
    %17 = vector.load %arg7[%c0_12, %c0_13] : memref<32x16xbf16, #tpu.memory_space<vmem>>, vector<32x16xbf16>
    %cst_14 = arith.constant dense<0.000000e+00> : vector<256x16xf32>
    %18 = tpu.matmul %16, %17, %cst_14 {dimension_numbers = #tpu.dot_dimension_numbers<[1], [0], [0], [1], [0, 0, 1, 1], [], []>} : vector<256x32xbf16>, vector<32x16xbf16>, vector<256x16xf32> -> vector<256x16xf32>
    %c0_15 = arith.constant 0 : index
    %c0_16 = arith.constant 0 : index
    %19 = vector.load %arg8[%c0_15, %c0_16] : memref<1x16xf32, #tpu.memory_space<vmem>>, vector<1x16xf32>
    %20 = vector.broadcast %19 : vector<1x16xf32> to vector<256x16xf32>
    %21 = arith.addf %18, %20 : vector<256x16xf32>
    %22 = vector.extract_strided_slice %21 {offsets = [0, 0], sizes = [256, 8], strides = [1, 1]} : vector<256x16xf32> to vector<256x8xf32>
    %23 = vector.extract_strided_slice %21 {offsets = [0, 8], sizes = [256, 8], strides = [1, 1]} : vector<256x16xf32> to vector<256x8xf32>
    %cst_17 = arith.constant -4.000000e+00 : f32
    %cst_18 = arith.constant 1.500000e+01 : f32
    %24 = vector.broadcast %cst_17 : f32 to vector<256x8xf32>
    %25 = arith.maximumf %24, %23 : vector<256x8xf32>
    %26 = vector.broadcast %cst_18 : f32 to vector<256x8xf32>
    %27 = arith.minimumf %26, %25 : vector<256x8xf32>
    %28 = math.exp %27 : vector<256x8xf32>
    %c0_19 = arith.constant 0 : index
    %c0_20 = arith.constant 0 : index
    %29 = vector.load %arg2[%c0_19, %c0_20] : memref<256x8xf32, #tpu.memory_space<vmem>>, vector<256x8xf32>
    %30 = arith.mulf %28, %29 : vector<256x8xf32>
    %31 = arith.addf %22, %30 : vector<256x8xf32>
    %32 = arith.truncf %31 : vector<256x8xf32> to vector<256x8xbf16>
    %c0_21 = arith.constant 0 : index
    %c0_22 = arith.constant 0 : index
    %33 = vector.load %arg9[%c0_21, %c0_22] : memref<8x32xbf16, #tpu.memory_space<vmem>>, vector<8x32xbf16>
    %cst_23 = arith.constant dense<0.000000e+00> : vector<256x32xf32>
    %34 = tpu.matmul %32, %33, %cst_23 {dimension_numbers = #tpu.dot_dimension_numbers<[1], [0], [0], [1], [0, 0, 1, 1], [], []>} : vector<256x8xbf16>, vector<8x32xbf16>, vector<256x32xf32> -> vector<256x32xf32>
    %c0_24 = arith.constant 0 : index
    %c0_25 = arith.constant 0 : index
    %35 = vector.load %arg10[%c0_24, %c0_25] : memref<1x32xf32, #tpu.memory_space<vmem>>, vector<1x32xf32>
    %36 = vector.broadcast %35 : vector<1x32xf32> to vector<256x32xf32>
    %37 = arith.addf %34, %36 : vector<256x32xf32>
    %cst_26 = arith.constant 0.000000e+00 : f32
    %38 = vector.broadcast %cst_26 : f32 to vector<256x32xf32>
    %39 = arith.maximumf %37, %38 : vector<256x32xf32>
    %40 = arith.truncf %39 : vector<256x32xf32> to vector<256x32xbf16>
    %c0_27 = arith.constant 0 : index
    %c0_28 = arith.constant 0 : index
    %41 = vector.load %arg11[%c0_27, %c0_28] : memref<32x32xbf16, #tpu.memory_space<vmem>>, vector<32x32xbf16>
    %cst_29 = arith.constant dense<0.000000e+00> : vector<256x32xf32>
    %42 = tpu.matmul %40, %41, %cst_29 {dimension_numbers = #tpu.dot_dimension_numbers<[1], [0], [0], [1], [0, 0, 1, 1], [], []>} : vector<256x32xbf16>, vector<32x32xbf16>, vector<256x32xf32> -> vector<256x32xf32>
    %c0_30 = arith.constant 0 : index
    %c0_31 = arith.constant 0 : index
    %43 = vector.load %arg12[%c0_30, %c0_31] : memref<1x32xf32, #tpu.memory_space<vmem>>, vector<1x32xf32>
    %44 = vector.broadcast %43 : vector<1x32xf32> to vector<256x32xf32>
    %45 = arith.addf %42, %44 : vector<256x32xf32>
    %cst_32 = arith.constant 0.000000e+00 : f32
    %46 = vector.broadcast %cst_32 : f32 to vector<256x32xf32>
    %47 = arith.maximumf %45, %46 : vector<256x32xf32>
    %48 = arith.truncf %47 : vector<256x32xf32> to vector<256x32xbf16>
    %c0_33 = arith.constant 0 : index
    %c0_34 = arith.constant 0 : index
    %49 = vector.load %arg13[%c0_33, %c0_34] : memref<32x16xbf16, #tpu.memory_space<vmem>>, vector<32x16xbf16>
    %cst_35 = arith.constant dense<0.000000e+00> : vector<256x16xf32>
    %50 = tpu.matmul %48, %49, %cst_35 {dimension_numbers = #tpu.dot_dimension_numbers<[1], [0], [0], [1], [0, 0, 1, 1], [], []>} : vector<256x32xbf16>, vector<32x16xbf16>, vector<256x16xf32> -> vector<256x16xf32>
    %c0_36 = arith.constant 0 : index
    %c0_37 = arith.constant 0 : index
    %51 = vector.load %arg14[%c0_36, %c0_37] : memref<1x16xf32, #tpu.memory_space<vmem>>, vector<1x16xf32>
    %52 = vector.broadcast %51 : vector<1x16xf32> to vector<256x16xf32>
    %53 = arith.addf %50, %52 : vector<256x16xf32>
    %54 = math.tanh %53 : vector<256x16xf32>
    %cst_38 = arith.constant 1.000000e+00 : f32
    %55 = vector.broadcast %cst_38 : f32 to vector<256x16xf32>
    %56 = arith.mulf %55, %54 : vector<256x16xf32>
    %c0_39 = arith.constant 0 : index
    %c0_40 = arith.constant 0 : index
    %57 = vector.load %arg15[%c0_39, %c0_40] : memref<256x32xf32, #tpu.memory_space<vmem>>, vector<256x16xf32>
    tpu.vector_store %arg15[%c0_39, %c0_40], %56 {strides = array<i32>} : memref<256x32xf32, #tpu.memory_space<vmem>>, vector<256x16xf32>,
    %c0_41 = arith.constant 0 : index
    %c16 = arith.constant 16 : index
    %58 = vector.load %arg15[%c0_41, %c16] : memref<256x32xf32, #tpu.memory_space<vmem>>, vector<256x8xf32>
    tpu.vector_store %arg15[%c0_41, %c16], %22 {strides = array<i32>} : memref<256x32xf32, #tpu.memory_space<vmem>>, vector<256x8xf32>,
    %c0_42 = arith.constant 0 : index
    %c24 = arith.constant 24 : index
    %59 = vector.load %arg15[%c0_42, %c24] : memref<256x32xf32, #tpu.memory_space<vmem>>, vector<256x8xf32>
    tpu.vector_store %arg15[%c0_42, %c24], %28 {strides = array<i32>} : memref<256x32xf32, #tpu.memory_space<vmem>>, vector<256x8xf32>,
    return
  }
  func.func @transform_0(%arg0: i32) -> (i32, i32) {
    %c0_i32 = arith.constant 0 : i32
    %c0_i32_0 = arith.constant 0 : i32
    return %arg0, %c0_i32 : i32, i32
  }
  func.func @transform_1(%arg0: i32) -> (i32, i32) {
    %c0_i32 = arith.constant 0 : i32
    %c0_i32_0 = arith.constant 0 : i32
    return %arg0, %c0_i32 : i32, i32
  }
  func.func @transform_2(%arg0: i32) -> (i32, i32) {
    %c0_i32 = arith.constant 0 : i32
    %c0_i32_0 = arith.constant 0 : i32
    %c0_i32_1 = arith.constant 0 : i32
    return %c0_i32, %c0_i32_0 : i32, i32
  }
  func.func @transform_3(%arg0: i32) -> (i32, i32) {
    %c0_i32 = arith.constant 0 : i32
    %c0_i32_0 = arith.constant 0 : i32
    %c0_i32_1 = arith.constant 0 : i32
    return %c0_i32, %c0_i32_0 : i32, i32
  }
  func.func @transform_4(%arg0: i32) -> (i32, i32) {
    %c0_i32 = arith.constant 0 : i32
    %c0_i32_0 = arith.constant 0 : i32
    %c0_i32_1 = arith.constant 0 : i32
    return %c0_i32, %c0_i32_0 : i32, i32
  }
  func.func @transform_5(%arg0: i32) -> (i32, i32) {
    %c0_i32 = arith.constant 0 : i32
    %c0_i32_0 = arith.constant 0 : i32
    %c0_i32_1 = arith.constant 0 : i32
    return %c0_i32, %c0_i32_0 : i32, i32
  }
  func.func @transform_6(%arg0: i32) -> (i32, i32) {
    %c0_i32 = arith.constant 0 : i32
    %c0_i32_0 = arith.constant 0 : i32
    %c0_i32_1 = arith.constant 0 : i32
    return %c0_i32, %c0_i32_0 : i32, i32
  }
  func.func @transform_7(%arg0: i32) -> (i32, i32) {
    %c0_i32 = arith.constant 0 : i32
    %c0_i32_0 = arith.constant 0 : i32
    %c0_i32_1 = arith.constant 0 : i32
    return %c0_i32, %c0_i32_0 : i32, i32
  }
  func.func @transform_8(%arg0: i32) -> (i32, i32) {
    %c0_i32 = arith.constant 0 : i32
    %c0_i32_0 = arith.constant 0 : i32
    %c0_i32_1 = arith.constant 0 : i32
    return %c0_i32, %c0_i32_0 : i32, i32
  }
  func.func @transform_9(%arg0: i32) -> (i32, i32) {
    %c0_i32 = arith.constant 0 : i32
    %c0_i32_0 = arith.constant 0 : i32
    %c0_i32_1 = arith.constant 0 : i32
    return %c0_i32, %c0_i32_0 : i32, i32
  }
  func.func @transform_10(%arg0: i32) -> (i32, i32) {
    %c0_i32 = arith.constant 0 : i32
    %c0_i32_0 = arith.constant 0 : i32
    %c0_i32_1 = arith.constant 0 : i32
    return %c0_i32, %c0_i32_0 : i32, i32
  }
  func.func @transform_11(%arg0: i32) -> (i32, i32) {
    %c0_i32 = arith.constant 0 : i32
    %c0_i32_0 = arith.constant 0 : i32
    %c0_i32_1 = arith.constant 0 : i32
    return %c0_i32, %c0_i32_0 : i32, i32
  }
  func.func @transform_12(%arg0: i32) -> (i32, i32) {
    %c0_i32 = arith.constant 0 : i32
    %c0_i32_0 = arith.constant 0 : i32
    %c0_i32_1 = arith.constant 0 : i32
    return %c0_i32, %c0_i32_0 : i32, i32
  }
  func.func @transform_13(%arg0: i32) -> (i32, i32) {
    %c0_i32 = arith.constant 0 : i32
    %c0_i32_0 = arith.constant 0 : i32
    %c0_i32_1 = arith.constant 0 : i32
    return %c0_i32, %c0_i32_0 : i32, i32
  }
  func.func @transform_14(%arg0: i32) -> (i32, i32) {
    %c0_i32 = arith.constant 0 : i32
    %c0_i32_0 = arith.constant 0 : i32
    return %arg0, %c0_i32 : i32, i32
  }
}

</mosaic_0001>

<llo_original>
// kernel: vae_state_forward.1
$region0: #{vae_state_forward.1}
  #allocation0 [shape = 'u32[]', space=smem, size = 0x4, offset = 0x4, fixed_abs, tag = 'smem constant byte address 0x4 - core index']
  #allocation1 [shape = 'u32[144,128]{1,0:T(1,128)}', space=vmem, size = 0x12000, scoped, tag = 'internal scratch']
  %s0 = inlined_call_operand.vmem [shape: bf16[512,16], index: 0, kind: input, shape index: {}]
  %s1 = inlined_call_operand.vmem [shape: f32[512,8], index: 1, kind: input, shape index: {}]
  %s2 = inlined_call_operand.vmem [shape: bf16[16,32], index: 2, kind: input, shape index: {}]
  %s3 = inlined_call_operand.vmem [shape: f32[1,32], index: 3, kind: input, shape index: {}]
  %s4 = inlined_call_operand.vmem [shape: bf16[32,32], index: 4, kind: input, shape index: {}]
  %s5 = inlined_call_operand.vmem [shape: f32[1,32], index: 5, kind: input, shape index: {}]
  %s6 = inlined_call_operand.vmem [shape: bf16[32,16], index: 6, kind: input, shape index: {}]
  %s7 = inlined_call_operand.vmem [shape: f32[1,16], index: 7, kind: input, shape index: {}]
  %s8 = inlined_call_operand.vmem [shape: bf16[8,32], index: 8, kind: input, shape index: {}]
  %s9 = inlined_call_operand.vmem [shape: f32[1,32], index: 9, kind: input, shape index: {}]
  %s10 = inlined_call_operand.vmem [shape: bf16[32,32], index: 10, kind: input, shape index: {}]
  %s11 = inlined_call_operand.vmem [shape: f32[1,32], index: 11, kind: input, shape index: {}]
  %s12 = inlined_call_operand.vmem [shape: bf16[32,16], index: 12, kind: input, shape index: {}]
  %s13 = inlined_call_operand.vmem [shape: f32[1,16], index: 13, kind: input, shape index: {}]
  %s14 = inlined_call_operand.vmem [shape: f32[512,32], index: 14, kind: output, shape index: {}]
  %s15 = sld [smem:[#allocation0]]
  $region89: #{vae_state_forward.1} parent=0
    _
  %s17 = ssub.s32 1, %s15
  %s18 = scalar_select 0, %s17, %s15
  loop: start=0, step=1, limit=4
  $region2: #{vae_state_forward.1} parent=0 // loop_pre_header
    _
  $region3: #{vae_state_forward.1} parent=0 // loop_header
    %s20 = sphi 0, %s24
    %p21 = scmp.ge.s32.totalorder %s20, 4
    %s30 = sphi 0, %s32
    %s33 = sphi 0, %s30
    %s34 = sphi 0, %s33
    %s50 = sphi 0, %s34
    %s56 = sphi 0, %s58
    %s59 = sphi 0, %s56
    %s60 = sphi 0, %s59
    %s76 = sphi 0, %s60
    %s80 = sphi 0, %s80
    %s82 = sphi 0, %s80
    %s83 = sphi 0, %s82
    %s97 = sphi 0, %s83
    %s101 = sphi 0, %s101
    %s103 = sphi 0, %s101
    %s104 = sphi 0, %s103
    %s118 = sphi 0, %s104
    %s122 = sphi 0, %s122
    %s124 = sphi 0, %s122
    %s125 = sphi 0, %s124
    %s139 = sphi 0, %s125
    %s143 = sphi 0, %s143
    %s145 = sphi 0, %s143
    %s146 = sphi 0, %s145
    %s160 = sphi 0, %s146
    %s164 = sphi 0, %s164
    %s166 = sphi 0, %s164
    %s167 = sphi 0, %s166
    %s181 = sphi 0, %s167
    %s185 = sphi 0, %s185
    %s187 = sphi 0, %s185
    %s188 = sphi 0, %s187
    %s202 = sphi 0, %s188
    %s206 = sphi 0, %s206
    %s208 = sphi 0, %s206
    %s209 = sphi 0, %s208
    %s223 = sphi 0, %s209
    %s227 = sphi 0, %s227
    %s229 = sphi 0, %s227
    %s230 = sphi 0, %s229
    %s244 = sphi 0, %s230
    %s248 = sphi 0, %s248
    %s250 = sphi 0, %s248
    %s251 = sphi 0, %s250
    %s265 = sphi 0, %s251
    %s269 = sphi 0, %s269
    %s271 = sphi 0, %s269
    %s272 = sphi 0, %s271
    %s286 = sphi 0, %s272
    %s290 = sphi 0, %s290
    %s292 = sphi 0, %s290
    %s293 = sphi 0, %s292
    %s307 = sphi 0, %s293
    %s311 = sphi 0, %s311
    %s313 = sphi 0, %s311
    %s314 = sphi 0, %s313
    %s328 = sphi 0, %s314
    %s334 = sphi 0, %s336
    %s337 = sphi 0, %s334
    %s338 = sphi 0, %s337
    %s354 = sphi 0, %s338
  $region4: #{vae_state_forward.1} parent=0 // loop_header_branch
    %23 = sbr.rel (%p21) target = $region8
  $region5: #{vae_state_forward.1} parent=0 // loop_body
    %s25 = ssub.s32 %s20, 1
    %s26 = ssub.s32 %s20, 2
    %s27 = sadd.s32 %s20, 1
    %s28 = ssub.s32 %s20, %s27
    %p29 = scmp.eq.s32.totalorder %s28, 0
    %s31 = sadd.s32 %s30, 1
    %s32 = scalar_select %p29, %s30, %s31
    %p35 = pneg %p29
    %p36 = scmp.eq.s32.totalorder %s20, 1
    %p37 = por %p35, %p36
    %p38 = scmp.ne.s32.totalorder %s30, %s33
    %p39 = scmp.eq.s32.totalorder %s20, 0
    %p40 = por %p38, %p39
    %p41 = scmp.ne.s32.totalorder %s30, %s33
    %p42 = scmp.eq.s32.totalorder %s25, 1
    %p43 = por %p41, %p42
    %p44 = scmp.ne.s32.totalorder %s33, %s34
    %p45 = scmp.eq.s32.totalorder %s25, 0
    %p46 = por %p44, %p45
    %p47 = scmp.ne.s32.totalorder %s33, %s34
    %p48 = scmp.eq.s32.totalorder %s26, 1
    %p49 = por %p47, %p48
    %p51 = scmp.ne.s32.totalorder %s34, %s50
    %p52 = scmp.eq.s32.totalorder %s26, 0
    %p53 = por %p51, %p52
    %s54 = ssub.s32 %s20, %s27
    %p55 = scmp.eq.s32.totalorder %s54, 0
    %s57 = sadd.s32 %s56, 1
    %s58 = scalar_select %p55, %s56, %s57
    %p61 = pneg %p55
    %p62 = scmp.eq.s32.totalorder %s20, 1
    %p63 = por %p61, %p62
    %p64 = scmp.ne.s32.totalorder %s56, %s59
    %p65 = scmp.eq.s32.totalorder %s20, 0
    %p66 = por %p64, %p65
    %p67 = scmp.ne.s32.totalorder %s56, %s59
    %p68 = scmp.eq.s32.totalorder %s25, 1
    %p69 = por %p67, %p68
    %p70 = scmp.ne.s32.totalorder %s59, %s60
    %p71 = scmp.eq.s32.totalorder %s25, 0
    %p72 = por %p70, %p71
    %p73 = scmp.ne.s32.totalorder %s59, %s60
    %p74 = scmp.eq.s32.totalorder %s26, 1
    %p75 = por %p73, %p74
    %p77 = scmp.ne.s32.totalorder %s60, %s76
    %p78 = scmp.eq.s32.totalorder %s26, 0
    %p79 = por %p77, %p78
    %s81 = sadd.s32 %s80, 1
    %p84 = scmp.eq.s32.totalorder %s20, 1
    %p85 = scmp.ne.s32.totalorder %s80, %s82
    %p86 = scmp.eq.s32.totalorder %s20, 0
    %p87 = por %p85, %p86
    %p88 = scmp.ne.s32.totalorder %s80, %s82
    %p89 = scmp.eq.s32.totalorder %s25, 1
    %p90 = por %p88, %p89
    %p91 = scmp.ne.s32.totalorder %s82, %s83
    %p92 = scmp.eq.s32.totalorder %s25, 0
    %p93 = por %p91, %p92
    %p94 = scmp.ne.s32.totalorder %s82, %s83
    %p95 = scmp.eq.s32.totalorder %s26, 1
    %p96 = por %p94, %p95
    %p98 = scmp.ne.s32.totalorder %s83, %s97
    %p99 = scmp.eq.s32.totalorder %s26, 0
    %p100 = por %p98, %p99
    %s102 = sadd.s32 %s101, 1
    %p105 = scmp.eq.s32.totalorder %s20, 1
    %p106 = scmp.ne.s32.totalorder %s101, %s103
    %p107 = scmp.eq.s32.totalorder %s20, 0
    %p108 = por %p106, %p107
    %p109 = scmp.ne.s32.totalorder %s101, %s103
    %p110 = scmp.eq.s32.totalorder %s25, 1
    %p111 = por %p109, %p110
    %p112 = scmp.ne.s32.totalorder %s103, %s104
    %p113 = scmp.eq.s32.totalorder %s25, 0
    %p114 = por %p112, %p113
    %p115 = scmp.ne.s32.totalorder %s103, %s104
    %p116 = scmp.eq.s32.totalorder %s26, 1
    %p117 = por %p115, %p116
    %p119 = scmp.ne.s32.totalorder %s104, %s118
    %p120 = scmp.eq.s32.totalorder %s26, 0
    %p121 = por %p119, %p120
    %s123 = sadd.s32 %s122, 1
    %p126 = scmp.eq.s32.totalorder %s20, 1
    %p127 = scmp.ne.s32.totalorder %s122, %s124
    %p128 = scmp.eq.s32.totalorder %s20, 0
    %p129 = por %p127, %p128
    %p130 = scmp.ne.s32.totalorder %s122, %s124
    %p131 = scmp.eq.s32.totalorder %s25, 1
    %p132 = por %p130, %p131
    %p133 = scmp.ne.s32.totalorder %s124, %s125
    %p134 = scmp.eq.s32.totalorder %s25, 0
    %p135 = por %p133, %p134
    %p136 = scmp.ne.s32.totalorder %s124, %s125
    %p137 = scmp.eq.s32.totalorder %s26, 1
    %p138 = por %p136, %p137
    %p140 = scmp.ne.s32.totalorder %s125, %s139
    %p141 = scmp.eq.s32.totalorder %s26, 0
    %p142 = por %p140, %p141
    %s144 = sadd.s32 %s143, 1
    %p147 = scmp.eq.s32.totalorder %s20, 1
    %p148 = scmp.ne.s32.totalorder %s143, %s145
    %p149 = scmp.eq.s32.totalorder %s20, 0
    %p150 = por %p148, %p149
    %p151 = scmp.ne.s32.totalorder %s143, %s145
    %p152 = scmp.eq.s32.totalorder %s25, 1
    %p153 = por %p151, %p152
    %p154 = scmp.ne.s32.totalorder %s145, %s146
    %p155 = scmp.eq.s32.totalorder %s25, 0
    %p156 = por %p154, %p155
    %p157 = scmp.ne.s32.totalorder %s145, %s146
    %p158 = scmp.eq.s32.totalorder %s26, 1
    %p159 = por %p157, %p158
    %p161 = scmp.ne.s32.totalorder %s146, %s160
    %p162 = scmp.eq.s32.totalorder %s26, 0
    %p163 = por %p161, %p162
    %s165 = sadd.s32 %s164, 1
    %p168 = scmp.eq.s32.totalorder %s20, 1
    %p169 = scmp.ne.s32.totalorder %s164, %s166
    %p170 = scmp.eq.s32.totalorder %s20, 0
    %p171 = por %p169, %p170
    %p172 = scmp.ne.s32.totalorder %s164, %s166
    %p173 = scmp.eq.s32.totalorder %s25, 1
    %p174 = por %p172, %p173
    %p175 = scmp.ne.s32.totalorder %s166, %s167
    %p176 = scmp.eq.s32.totalorder %s25, 0
    %p177 = por %p175, %p176
    %p178 = scmp.ne.s32.totalorder %s166, %s167
    %p179 = scmp.eq.s32.totalorder %s26, 1
    %p180 = por %p178, %p179
    %p182 = scmp.ne.s32.totalorder %s167, %s181
    %p183 = scmp.eq.s32.totalorder %s26, 0
    %p184 = por %p182, %p183
    %s186 = sadd.s32 %s185, 1
    %p189 = scmp.eq.s32.totalorder %s20, 1
    %p190 = scmp.ne.s32.totalorder %s185, %s187
    %p191 = scmp.eq.s32.totalorder %s20, 0
    %p192 = por %p190, %p191
    %p193 = scmp.ne.s32.totalorder %s185, %s187
    %p194 = scmp.eq.s32.totalorder %s25, 1
    %p195 = por %p193, %p194
    %p196 = scmp.ne.s32.totalorder %s187, %s188
    %p197 = scmp.eq.s32.totalorder %s25, 0
    %p198 = por %p196, %p197
    %p199 = scmp.ne.s32.totalorder %s187, %s188
    %p200 = scmp.eq.s32.totalorder %s26, 1
    %p201 = por %p199, %p200
    %p203 = scmp.ne.s32.totalorder %s188, %s202
    %p204 = scmp.eq.s32.totalorder %s26, 0
    %p205 = por %p203, %p204
    %s207 = sadd.s32 %s206, 1
    %p210 = scmp.eq.s32.totalorder %s20, 1
    %p211 = scmp.ne.s32.totalorder %s206, %s208
    %p212 = scmp.eq.s32.totalorder %s20, 0
    %p213 = por %p211, %p212
    %p214 = scmp.ne.s32.totalorder %s206, %s208
    %p215 = scmp.eq.s32.totalorder %s25, 1
    %p216 = por %p214, %p215
    %p217 = scmp.ne.s32.totalorder %s208, %s209
    %p218 = scmp.eq.s32.totalorder %s25, 0
    %p219 = por %p217, %p218
    %p220 = scmp.ne.s32.totalorder %s208, %s209
    %p221 = scmp.eq.s32.totalorder %s26, 1
    %p222 = por %p220, %p221
    %p224 = scmp.ne.s32.totalorder %s209, %s223
    %p225 = scmp.eq.s32.totalorder %s26, 0
    %p226 = por %p224, %p225
    %s228 = sadd.s32 %s227, 1
    %p231 = scmp.eq.s32.totalorder %s20, 1
    %p232 = scmp.ne.s32.totalorder %s227, %s229
    %p233 = scmp.eq.s32.totalorder %s20, 0
    %p234 = por %p232, %p233
    %p235 = scmp.ne.s32.totalorder %s227, %s229
    %p236 = scmp.eq.s32.totalorder %s25, 1
    %p237 = por %p235, %p236
    %p238 = scmp.ne.s32.totalorder %s229, %s230
    %p239 = scmp.eq.s32.totalorder %s25, 0
    %p240 = por %p238, %p239
    %p241 = scmp.ne.s32.totalorder %s229, %s230
    %p242 = scmp.eq.s32.totalorder %s26, 1
    %p243 = por %p241, %p242
    %p245 = scmp.ne.s32.totalorder %s230, %s244
    %p246 = scmp.eq.s32.totalorder %s26, 0
    %p247 = por %p245, %p246
    %s249 = sadd.s32 %s248, 1
    %p252 = scmp.eq.s32.totalorder %s20, 1
    %p253 = scmp.ne.s32.totalorder %s248, %s250
    %p254 = scmp.eq.s32.totalorder %s20, 0
    %p255 = por %p253, %p254
    %p256 = scmp.ne.s32.totalorder %s248, %s250
    %p257 = scmp.eq.s32.totalorder %s25, 1
    %p258 = por %p256, %p257
    %p259 = scmp.ne.s32.totalorder %s250, %s251
    %p260 = scmp.eq.s32.totalorder %s25, 0
    %p261 = por %p259, %p260
    %p262 = scmp.ne.s32.totalorder %s250, %s251
    %p263 = scmp.eq.s32.totalorder %s26, 1
    %p264 = por %p262, %p263
    %p266 = scmp.ne.s32.totalorder %s251, %s265
    %p267 = scmp.eq.s32.totalorder %s26, 0
    %p268 = por %p266, %p267
    %s270 = sadd.s32 %s269, 1
    %p273 = scmp.eq.s32.totalorder %s20, 1
    %p274 = scmp.ne.s32.totalorder %s269, %s271
    %p275 = scmp.eq.s32.totalorder %s20, 0
    %p276 = por %p274, %p275
    %p277 = scmp.ne.s32.totalorder %s269, %s271
    %p278 = scmp.eq.s32.totalorder %s25, 1
    %p279 = por %p277, %p278
    %p280 = scmp.ne.s32.totalorder %s271, %s272
    %p281 = scmp.eq.s32.totalorder %s25, 0
    %p282 = por %p280, %p281
    %p283 = scmp.ne.s32.totalorder %s271, %s272
    %p284 = scmp.eq.s32.totalorder %s26, 1
    %p285 = por %p283, %p284
    %p287 = scmp.ne.s32.totalorder %s272, %s286
    %p288 = scmp.eq.s32.totalorder %s26, 0
    %p289 = por %p287, %p288
    %s291 = sadd.s32 %s290, 1
    %p294 = scmp.eq.s32.totalorder %s20, 1
    %p295 = scmp.ne.s32.totalorder %s290, %s292
    %p296 = scmp.eq.s32.totalorder %s20, 0
    %p297 = por %p295, %p296
    %p298 = scmp.ne.s32.totalorder %s290, %s292
    %p299 = scmp.eq.s32.totalorder %s25, 1
    %p300 = por %p298, %p299
    %p301 = scmp.ne.s32.totalorder %s292, %s293
    %p302 = scmp.eq.s32.totalorder %s25, 0
    %p303 = por %p301, %p302
    %p304 = scmp.ne.s32.totalorder %s292, %s293
    %p305 = scmp.eq.s32.totalorder %s26, 1
    %p306 = por %p304, %p305
    %p308 = scmp.ne.s32.totalorder %s293, %s307
    %p309 = scmp.eq.s32.totalorder %s26, 0
    %p310 = por %p308, %p309
    %s312 = sadd.s32 %s311, 1
    %p315 = scmp.eq.s32.totalorder %s20, 1
    %p316 = scmp.ne.s32.totalorder %s311, %s313
    %p317 = scmp.eq.s32.totalorder %s20, 0
    %p318 = por %p316, %p317
    %p319 = scmp.ne.s32.totalorder %s311, %s313
    %p320 = scmp.eq.s32.totalorder %s25, 1
    %p321 = por %p319, %p320
    %p322 = scmp.ne.s32.totalorder %s313, %s314
    %p323 = scmp.eq.s32.totalorder %s25, 0
    %p324 = por %p322, %p323
    %p325 = scmp.ne.s32.totalorder %s313, %s314
    %p326 = scmp.eq.s32.totalorder %s26, 1
    %p327 = por %p325, %p326
    %p329 = scmp.ne.s32.totalorder %s314, %s328
    %p330 = scmp.eq.s32.totalorder %s26, 0
    %p331 = por %p329, %p330
    %s332 = ssub.s32 %s20, %s27
    %p333 = scmp.eq.s32.totalorder %s332, 0
    %s335 = sadd.s32 %s334, 1
    %s336 = scalar_select %p333, %s334, %s335
    %p339 = pneg %p333
    %p340 = scmp.eq.s32.totalorder %s20, 1
    %p341 = por %p339, %p340
    %p342 = scmp.ne.s32.totalorder %s334, %s337
    %p343 = scmp.eq.s32.totalorder %s20, 0
    %p344 = por %p342, %p343
    %p345 = scmp.ne.s32.totalorder %s334, %s337
    %p346 = scmp.eq.s32.totalorder %s25, 1
    %p347 = por %p345, %p346
    %p348 = scmp.ne.s32.totalorder %s337, %s338
    %p349 = scmp.eq.s32.totalorder %s25, 0
    %p350 = por %p348, %p349
    %p351 = scmp.ne.s32.totalorder %s337, %s338
    %p352 = scmp.eq.s32.totalorder %s26, 1
    %p353 = por %p351, %p352
    %p355 = scmp.ne.s32.totalorder %s338, %s354
    %p356 = scmp.eq.s32.totalorder %s26, 0
    %p357 = por %p355, %p356
    %p358 = scmp.le.s32.totalorder 1, %s20
    %p359 = scmp.lt.s32.totalorder %s20, 3
    %p360 = pnand %p358, %p359
    %p361 = pneg %p360
    // Predicated region
    $region9: #{vae_state_forward.1} parent=5 // pred_check
      _
    $region10: #{vae_state_forward.1} parent=5 // pred_check_branch
      %363 = sbr.rel (%p360) target = $region12
    $region11: #{vae_state_forward.1} parent=5 // pred_region
      %s364 = ssub.s32 %s20, 1
      // Predicated region
      $region13: #{vae_state_forward.1} parent=11 // pred_check
        %p365 = pneg %p93
      $region14: #{vae_state_forward.1} parent=11 // pred_check_branch
        %367 = sbr.rel (%p365) target = $region16
      $region15: #{vae_state_forward.1} parent=11 // pred_region
        _
      $region16: #{vae_state_forward.1} parent=11 // pred_fallthru
        _
      // Predicated region
      $region17: #{vae_state_forward.1} parent=11 // pred_check
        %p368 = pneg %p114
      $region18: #{vae_state_forward.1} parent=11 // pred_check_branch
        %370 = sbr.rel (%p368) target = $region20
      $region19: #{vae_state_forward.1} parent=11 // pred_region
        _
      $region20: #{vae_state_forward.1} parent=11 // pred_fallthru
        _
      // Predicated region
      $region21: #{vae_state_forward.1} parent=11 // pred_check
        %p371 = pneg %p135
      $region22: #{vae_state_forward.1} parent=11 // pred_check_branch
        %373 = sbr.rel (%p371) target = $region24
      $region23: #{vae_state_forward.1} parent=11 // pred_region
        _
      $region24: #{vae_state_forward.1} parent=11 // pred_fallthru
        _
      // Predicated region
      $region25: #{vae_state_forward.1} parent=11 // pred_check
        %p374 = pneg %p156
      $region26: #{vae_state_forward.1} parent=11 // pred_check_branch
        %376 = sbr.rel (%p374) target = $region28
      $region27: #{vae_state_forward.1} parent=11 // pred_region
        _
      $region28: #{vae_state_forward.1} parent=11 // pred_fallthru
        _
      // Predicated region
      $region29: #{vae_state_forward.1} parent=11 // pred_check
        %p377 = pneg %p177
      $region30: #{vae_state_forward.1} parent=11 // pred_check_branch
        %379 = sbr.rel (%p377) target = $region32
      $region31: #{vae_state_forward.1} parent=11 // pred_region
        _
      $region32: #{vae_state_forward.1} parent=11 // pred_fallthru
        _
      // Predicated region
      $region33: #{vae_state_forward.1} parent=11 // pred_check
        %p380 = pneg %p198
      $region34: #{vae_state_forward.1} parent=11 // pred_check_branch
        %382 = sbr.rel (%p380) target = $region36
      $region35: #{vae_state_forward.1} parent=11 // pred_region
        _
      $region36: #{vae_state_forward.1} parent=11 // pred_fallthru
        _
      // Predicated region
      $region37: #{vae_state_forward.1} parent=11 // pred_check
        %p383 = pneg %p219
      $region38: #{vae_state_forward.1} parent=11 // pred_check_branch
        %385 = sbr.rel (%p383) target = $region40
      $region39: #{vae_state_forward.1} parent=11 // pred_region
        _
      $region40: #{vae_state_forward.1} parent=11 // pred_fallthru
        _
      // Predicated region
      $region41: #{vae_state_forward.1} parent=11 // pred_check
        %p386 = pneg %p240
      $region42: #{vae_state_forward.1} parent=11 // pred_check_branch
        %388 = sbr.rel (%p386) target = $region44
      $region43: #{vae_state_forward.1} parent=11 // pred_region
        _
      $region44: #{vae_state_forward.1} parent=11 // pred_fallthru
        _
      // Predicated region
      $region45: #{vae_state_forward.1} parent=11 // pred_check
        %p389 = pneg %p261
      $region46: #{vae_state_forward.1} parent=11 // pred_check_branch
        %391 = sbr.rel (%p389) target = $region48
      $region47: #{vae_state_forward.1} parent=11 // pred_region
        _
      $region48: #{vae_state_forward.1} parent=11 // pred_fallthru
        _
      // Predicated region
      $region49: #{vae_state_forward.1} parent=11 // pred_check
        %p392 = pneg %p282
      $region50: #{vae_state_forward.1} parent=11 // pred_check_branch
        %394 = sbr.rel (%p392) target = $region52
      $region51: #{vae_state_forward.1} parent=11 // pred_region
        _
      $region52: #{vae_state_forward.1} parent=11 // pred_fallthru
        _
      // Predicated region
      $region53: #{vae_state_forward.1} parent=11 // pred_check
        %p395 = pneg %p303
      $region54: #{vae_state_forward.1} parent=11 // pred_check_branch
        %397 = sbr.rel (%p395) target = $region56
      $region55: #{vae_state_forward.1} parent=11 // pred_region
        _
      $region56: #{vae_state_forward.1} parent=11 // pred_fallthru
        _
      // Predicated region
      $region57: #{vae_state_forward.1} parent=11 // pred_check
        %p398 = pneg %p324
      $region58: #{vae_state_forward.1} parent=11 // pred_check_branch
        %400 = sbr.rel (%p398) target = $region60
      $region59: #{vae_state_forward.1} parent=11 // pred_region
        _
      $region60: #{vae_state_forward.1} parent=11 // pred_fallthru
        _
    $region12: #{vae_state_forward.1} parent=5 // pred_fallthru
      _
    %p401 = scmp.lt.s32.totalorder %s20, 2
    // Predicated region
    $region61: #{vae_state_forward.1} parent=5 // pred_check
      %p402 = pneg %p401
    $region62: #{vae_state_forward.1} parent=5 // pred_check_branch
      %404 = sbr.rel (%p402) target = $region64
    $region63: #{vae_state_forward.1} parent=5 // pred_region
      // Predicated region
      $region65: #{vae_state_forward.1} parent=63 // pred_check
        %p405 = pneg %p40
      $region66: #{vae_state_forward.1} parent=63 // pred_check_branch
        %407 = sbr.rel (%p405) target = $region68
      $region67: #{vae_state_forward.1} parent=63 // pred_region
        %s408 = smul.u32 32, %s20
        %p409 = scmp.lt.s32.totalorder %s408, 63
        %s410 = scalar_select %p409, %s408, 63
        %s411 = smul.addr %s410, 4
        %s412 = scalar_lea.vmem %s0, %s411
        %s413 = smul.u32 32, %s20
      $region68: #{vae_state_forward.1} parent=63 // pred_fallthru
        _
      // Predicated region
      $region69: #{vae_state_forward.1} parent=63 // pred_check
        %p414 = pneg %p66
      $region70: #{vae_state_forward.1} parent=63 // pred_check_branch
        %416 = sbr.rel (%p414) target = $region72
      $region71: #{vae_state_forward.1} parent=63 // pred_region
        %s417 = smul.u32 32, %s20
        %p418 = scmp.lt.s32.totalorder %s417, 63
        %s419 = scalar_select %p418, %s417, 63
        %s420 = smul.addr %s419, 8
        %s421 = scalar_lea.vmem %s1, %s420
        %s422 = smul.u32 32, %s20
      $region72: #{vae_state_forward.1} parent=63 // pred_fallthru
        _
    $region64: #{vae_state_forward.1} parent=5 // pred_fallthru
      _
    %p423 = scmp.le.s32.totalorder 1, %s20
    %p424 = scmp.lt.s32.totalorder %s20, 3
    %p425 = pnand %p423, %p424
    %p426 = pneg %p425
    // Predicated region
    $region73: #{vae_state_forward.1} parent=5 // pred_check
      _
    $region74: #{vae_state_forward.1} parent=5 // pred_check_branch
      %428 = sbr.rel (%p425) target = $region76
    $region75: #{vae_state_forward.1} parent=5 // pred_region
      %s429 = ssub.s32 %s20, 1
      %s430 = smul.u32 32, %s25
      %p431 = scmp.lt.s32.totalorder %s430, 63
      %s432 = scalar_select %p431, %s430, 63
      %s433 = smul.addr %s432, 4
      %s434 = scalar_lea.vmem %s0, %s433
      %p435 = pneg %p46
      %p436 = pneg %p43
      %s437 = smul.u32 32, %s25
      %p438 = scmp.lt.s32.totalorder %s437, 63
      %s439 = scalar_select %p438, %s437, 63
      %s440 = smul.addr %s439, 8
      %s441 = scalar_lea.vmem %s1, %s440
      %p442 = pneg %p72
      %p443 = pneg %p69
      %p444 = pneg %p93
      %p445 = pneg %p90
      %p446 = pneg %p114
      %p447 = pneg %p111
      %p448 = pneg %p135
      %p449 = pneg %p132
      %p450 = pneg %p156
      %p451 = pneg %p153
      %p452 = pneg %p177
      %p453 = pneg %p174
      %p454 = pneg %p198
      %p455 = pneg %p195
      %p456 = pneg %p219
      %p457 = pneg %p216
      %p458 = pneg %p240
      %p459 = pneg %p237
      %p460 = pneg %p261
      %p461 = pneg %p258
      %p462 = pneg %p282
      %p463 = pneg %p279
      %p464 = pneg %p303
      %p465 = pneg %p300
      %p466 = pneg %p324
      %p467 = pneg %p321
      %p468 = pneg %p350
      %p469 = pneg %p347
      %s470 = smul.u32 32, %s25
      %p471 = scmp.lt.s32.totalorder %s470, 63
      %s472 = scalar_select %p471, %s470, 63
      %s473 = smul.addr %s472, 8
      %s474 = scalar_lea.vmem %s14, %s473
      %s475 = smul.u32 32, %s25
      %p476 = scmp.lt.s32.totalorder %s475, 63
      %s477 = scalar_select %p476, %s475, 63
      %s478 = smul.addr %s477, 4
      %s479 = scalar_lea.vmem %s0, %s478
      %s480 = smul.u32 32, %s25
      %s481 = smul.u32 32, %s25
      %p482 = scmp.lt.s32.totalorder %s481, 63
      %s483 = scalar_select %p482, %s481, 63
      %s484 = smul.addr %s483, 8
      %s485 = scalar_lea.vmem %s1, %s484
      %s486 = smul.u32 32, %s25
      %s487 = smul.u32 32, %s25
      %p488 = scmp.lt.s32.totalorder %s487, 63
      %s489 = scalar_select %p488, %s487, 63
      %s490 = smul.addr %s489, 8
      %s491 = scalar_lea.vmem %s14, %s490
      %s492 = smul.u32 32, %s25
      %v494 = vld [vmem:[%s479] sm:$0xf]
      %v495 = vld [vmem:[%s479 + $0x4] sm:$0xf]
      %v496 = vld [vmem:[%s479 + $0x8] sm:$0xf]
      %v497 = vld [vmem:[%s479 + $0xc] sm:$0xf]
      %v498 = vld [vmem:[%s479 + $0x10] sm:$0xf]
      %v499 = vld [vmem:[%s479 + $0x14] sm:$0xf]
      %v500 = vld [vmem:[%s479 + $0x18] sm:$0xf]
      %v501 = vld [vmem:[%s479 + $0x1c] sm:$0xf]
      %v502 = vld [vmem:[%s479 + $0x20] sm:$0xf]
      %v503 = vld [vmem:[%s479 + $0x24] sm:$0xf]
      %v504 = vld [vmem:[%s479 + $0x28] sm:$0xf]
      %v505 = vld [vmem:[%s479 + $0x2c] sm:$0xf]
      %v506 = vld [vmem:[%s479 + $0x30] sm:$0xf]
      %v507 = vld [vmem:[%s479 + $0x34] sm:$0xf]
      %v508 = vld [vmem:[%s479 + $0x38] sm:$0xf]
      %v509 = vld [vmem:[%s479 + $0x3c] sm:$0xf]
      %v510 = vld [vmem:[%s479 + $0x40] sm:$0xf]
      %v511 = vld [vmem:[%s479 + $0x44] sm:$0xf]
      %v512 = vld [vmem:[%s479 + $0x48] sm:$0xf]
      %v513 = vld [vmem:[%s479 + $0x4c] sm:$0xf]
      %v514 = vld [vmem:[%s479 + $0x50] sm:$0xf]
      %v515 = vld [vmem:[%s479 + $0x54] sm:$0xf]
      %v516 = vld [vmem:[%s479 + $0x58] sm:$0xf]
      %v517 = vld [vmem:[%s479 + $0x5c] sm:$0xf]
      %v518 = vld [vmem:[%s479 + $0x60] sm:$0xf]
      %v519 = vld [vmem:[%s479 + $0x64] sm:$0xf]
      %v520 = vld [vmem:[%s479 + $0x68] sm:$0xf]
      %v521 = vld [vmem:[%s479 + $0x6c] sm:$0xf]
      %v522 = vld [vmem:[%s479 + $0x70] sm:$0xf]
      %v523 = vld [vmem:[%s479 + $0x74] sm:$0xf]
      %v524 = vld [vmem:[%s479 + $0x78] sm:$0xf]
      %v525 = vld [vmem:[%s479 + $0x7c] sm:$0xf]
      %v526 = vld [vmem:[%s2] sm:$0xf]
      %v527 = vld [vmem:[%s2 + $0x4] sm:$0xf]
      %v528 = vld [vmem:[%s3] sm:$0x1]
      %v530 = vlaneseq
      %v531 = vshrl.u32 %v530, 7
      %v532 = vsub.s32 0, %v531
      %v533 = vrot.slane %v528, %v532
      %v567 = vunpack.c.l.b16 %v494
      %v568 = vunpack.c.l.b16 %v495
      %v569 = vunpack.c.l.b16 %v496
      %v570 = vunpack.c.l.b16 %v497
      %v571 = vunpack.c.l.b16 %v498
      %v572 = vunpack.c.l.b16 %v499
      %v573 = vunpack.c.l.b16 %v500
      %v574 = vunpack.c.l.b16 %v501
      %v575 = vunpack.c.l.b16 %v502
      %v576 = vunpack.c.l.b16 %v503
      %v577 = vunpack.c.l.b16 %v504
      %v578 = vunpack.c.l.b16 %v505
      %v579 = vunpack.c.l.b16 %v506
      %v580 = vunpack.c.l.b16 %v507
      %v581 = vunpack.c.l.b16 %v508
      %v582 = vunpack.c.l.b16 %v509
      %v583 = vunpack.c.l.b16 %v510
      %v584 = vunpack.c.l.b16 %v511
      %v585 = vunpack.c.l.b16 %v512
      %v586 = vunpack.c.l.b16 %v513
      %v587 = vunpack.c.l.b16 %v514
      %v588 = vunpack.c.l.b16 %v515
      %v589 = vunpack.c.l.b16 %v516
      %v590 = vunpack.c.l.b16 %v517
      %v591 = vunpack.c.l.b16 %v518
      %v592 = vunpack.c.l.b16 %v519
      %v593 = vunpack.c.l.b16 %v520
      %v594 = vunpack.c.l.b16 %v521
      %v595 = vunpack.c.l.b16 %v522
      %v596 = vunpack.c.l.b16 %v523
      %v597 = vunpack.c.l.b16 %v524
      %v598 = vunpack.c.l.b16 %v525
      %v599 = vpack.c.b16 %v568, %v567
      %v600 = vpack.c.b16 %v570, %v569
      %v601 = vpack.c.b16 %v572, %v571
      %v602 = vpack.c.b16 %v574, %v573
      %v603 = vpack.c.b16 %v576, %v575
      %v604 = vpack.c.b16 %v578, %v577
      %v605 = vpack.c.b16 %v580, %v579
      %v606 = vpack.c.b16 %v582, %v581
      %v607 = vpack.c.b16 %v584, %v583
      %v608 = vpack.c.b16 %v586, %v585
      %v609 = vpack.c.b16 %v588, %v587
      %v610 = vpack.c.b16 %v590, %v589
      %v611 = vpack.c.b16 %v592, %v591
      %v612 = vpack.c.b16 %v594, %v593
      %v613 = vpack.c.b16 %v596, %v595
      %v614 = vpack.c.b16 %v598, %v597
      %v617 = vunpack.c.l.b16 %v526
      %v618 = vunpack.c.l.b16 %v527
      %v619 = vpack.c.b16 %v618, %v617
      %vm621 = vcmask 130048
      %v623 = vsel %vm621, %v599, 0
      %v626 = vsel %vm621, %v600, 0
      %v629 = vsel %vm621, %v601, 0
      %v632 = vsel %vm621, %v602, 0
      %v635 = vsel %vm621, %v603, 0
      %v638 = vsel %vm621, %v604, 0
      %v641 = vsel %vm621, %v605, 0
      %v644 = vsel %vm621, %v606, 0
      %v647 = vsel %vm621, %v607, 0
      %v650 = vsel %vm621, %v608, 0
      %v653 = vsel %vm621, %v609, 0
      %v656 = vsel %vm621, %v610, 0
      %v659 = vsel %vm621, %v611, 0
      %v662 = vsel %vm621, %v612, 0
      %v665 = vsel %vm621, %v613, 0
      %v668 = vsel %vm621, %v614, 0
      %670 = vmatprep.subr.bf16.mxu0 0
      %671 = vmatpush1.bf16.msra.mxu0 %v619
      %672 = vmatprep.subr.bf16.mxu0 0
      %673 = vmatpush1.bf16.msra.mxu0 0
      %674 = vmatprep.subr.bf16.mxu0 0
      %675 = vmatpush1.bf16.msra.mxu0 0
      %676 = vmatprep.subr.bf16.mxu0 0
      %677 = vmatpush1.bf16.msra.mxu0 0
      %678 = vmatprep.subr.bf16.mxu0 0
      %679 = vmatpush1.bf16.msra.mxu0 0
      %680 = vmatprep.subr.bf16.mxu0 0
      %681 = vmatpush1.bf16.msra.mxu0 0
      %682 = vmatprep.subr.bf16.mxu0 0
      %683 = vmatpush1.bf16.msra.mxu0 0
      %684 = vmatprep.subr.bf16.mxu0 0
      %685 = vmatpush1.bf16.msra.mxu0 0
      %686 = vmatprep.subr.bf16.mxu0 0
      %687 = vmatpush1.bf16.msra.mxu0 0
      %688 = vmatprep.subr.bf16.mxu0 0
      %689 = vmatpush1.bf16.msra.mxu0 0
      %690 = vmatprep.subr.bf16.mxu0 0
      %691 = vmatpush1.bf16.msra.mxu0 0
      %692 = vmatprep.subr.bf16.mxu0 0
      %693 = vmatpush1.bf16.msra.mxu0 0
      %694 = vmatprep.subr.bf16.mxu0 0
      %695 = vmatpush1.bf16.msra.mxu0 0
      %696 = vmatprep.subr.bf16.mxu0 0
      %697 = vmatpush1.bf16.msra.mxu0 0
      %698 = vmatprep.subr.bf16.mxu0 0
      %699 = vmatpush1.bf16.msra.mxu0 0
      %700 = vmatprep.subr.bf16.mxu0 0
      %701 = vmatpush1.bf16.msra.mxu0 0
      %702 = vmatprep.mubr.bf16.mxu0 0
      %703 = vmatmul.mubr.bf16.gmra.mrb[0].mxu0 %v623
      %v704 = vpop.f32.mrb[0].mxu0
      %v705 = vadd.f32 %v533, %v704
      %v706 = vpop.f32.mrb[0].mxu0
      %v707 = vpop.f32.mrb[0].mxu0
      %v708 = vadd.f32 %v533, %v707
      %v709 = vpop.f32.mrb[0].mxu0
      %710 = vmatprep.mubr.bf16.mxu0 0
      %711 = vmatmul.mubr.bf16.gmra.mrb[0].mxu0 %v626
      %v712 = vpop.f32.mrb[0].mxu0
      %v713 = vadd.f32 %v533, %v712
      %v714 = vpop.f32.mrb[0].mxu0
      %v715 = vpop.f32.mrb[0].mxu0
      %v716 = vadd.f32 %v533, %v715
      %v717 = vpop.f32.mrb[0].mxu0
      %718 = vmatprep.mubr.bf16.mxu0 0
      %719 = vmatmul.mubr.bf16.gmra.mrb[0].mxu0 %v629
      %v720 = vpop.f32.mrb[0].mxu0
      %v721 = vadd.f32 %v533, %v720
      %v722 = vpop.f32.mrb[0].mxu0
      %v723 = vpop.f32.mrb[0].mxu0
      %v724 = vadd.f32 %v533, %v723
      %v725 = vpop.f32.mrb[0].mxu0
      %726 = vmatprep.mubr.bf16.mxu0 0
      %727 = vmatmul.mubr.bf16.gmra.mrb[0].mxu0 %v632
      %v728 = vpop.f32.mrb[0].mxu0
      %v729 = vadd.f32 %v533, %v728
      %v730 = vpop.f32.mrb[0].mxu0
      %v731 = vpop.f32.mrb[0].mxu0
      %v732 = vadd.f32 %v533, %v731
      %v733 = vpop.f32.mrb[0].mxu0
      %734 = vmatprep.mubr.bf16.mxu0 0
      %735 = vmatmul.mubr.bf16.gmra.mrb[0].mxu0 %v635
      %v736 = vpop.f32.mrb[0].mxu0
      %v737 = vadd.f32 %v533, %v736
      %v738 = vpop.f32.mrb[0].mxu0
      %v739 = vpop.f32.mrb[0].mxu0
      %v740 = vadd.f32 %v533, %v739
      %v741 = vpop.f32.mrb[0].mxu0
      %742 = vmatprep.mubr.bf16.mxu0 0
      %743 = vmatmul.mubr.bf16.gmra.mrb[0].mxu0 %v638
      %v744 = vpop.f32.mrb[0].mxu0
      %v745 = vadd.f32 %v533, %v744
      %v746 = vpop.f32.mrb[0].mxu0
      %v747 = vpop.f32.mrb[0].mxu0
      %v748 = vadd.f32 %v533, %v747
      %v749 = vpop.f32.mrb[0].mxu0
      %750 = vmatprep.mubr.bf16.mxu0 0
      %751 = vmatmul.mubr.bf16.gmra.mrb[0].mxu0 %v641
      %v752 = vpop.f32.mrb[0].mxu0
      %v753 = vadd.f32 %v533, %v752
      %v754 = vpop.f32.mrb[0].mxu0
      %v755 = vpop.f32.mrb[0].mxu0
      %v756 = vadd.f32 %v533, %v755
      %v757 = vpop.f32.mrb[0].mxu0
      %758 = vmatprep.mubr.bf16.mxu0 0
      %759 = vmatmul.mubr.bf16.gmra.mrb[0].mxu0 %v644
      %v760 = vpop.f32.mrb[0].mxu0
      %v761 = vadd.f32 %v533, %v760
      %v762 = vpop.f32.mrb[0].mxu0
      %v763 = vpop.f32.mrb[0].mxu0
      %v764 = vadd.f32 %v533, %v763
      %v765 = vpop.f32.mrb[0].mxu0
      %766 = vmatprep.mubr.bf16.mxu0 0
      %767 = vmatmul.mubr.bf16.gmra.mrb[0].mxu0 %v647
      %v768 = vpop.f32.mrb[0].mxu0
      %v769 = vadd.f32 %v533, %v768
      %v770 = vpop.f32.mrb[0].mxu0
      %v771 = vpop.f32.mrb[0].mxu0
      %v772 = vadd.f32 %v533, %v771
      %v773 = vpop.f32.mrb[0].mxu0
      %774 = vmatprep.mubr.bf16.mxu0 0
      %775 = vmatmul.mubr.bf16.gmra.mrb[0].mxu0 %v650
      %v776 = vpop.f32.mrb[0].mxu0
      %v777 = vadd.f32 %v533, %v776
      %v778 = vpop.f32.mrb[0].mxu0
      %v779 = vpop.f32.mrb[0].mxu0
      %v780 = vadd.f32 %v533, %v779
      %v781 = vpop.f32.mrb[0].mxu0
      %782 = vmatprep.mubr.bf16.mxu0 0
      %783 = vmatmul.mubr.bf16.gmra.mrb[0].mxu0 %v653
      %v784 = vpop.f32.mrb[0].mxu0
      %v785 = vadd.f32 %v533, %v784
      %v786 = vpop.f32.mrb[0].mxu0
      %v787 = vpop.f32.mrb[0].mxu0
      %v788 = vadd.f32 %v533, %v787
      %v789 = vpop.f32.mrb[0].mxu0
      %790 = vmatprep.mubr.bf16.mxu0 0
      %791 = vmatmul.mubr.bf16.gmra.mrb[0].mxu0 %v656
      %v792 = vpop.f32.mrb[0].mxu0
      %v793 = vadd.f32 %v533, %v792
      %v794 = vpop.f32.mrb[0].mxu0
      %v795 = vpop.f32.mrb[0].mxu0
      %v796 = vadd.f32 %v533, %v795
      %v797 = vpop.f32.mrb[0].mxu0
      %798 = vmatprep.mubr.bf16.mxu0 0
      %799 = vmatmul.mubr.bf16.gmra.mrb[0].mxu0 %v659
      %v800 = vpop.f32.mrb[0].mxu0
      %v801 = vadd.f32 %v533, %v800
      %v802 = vpop.f32.mrb[0].mxu0
      %v803 = vpop.f32.mrb[0].mxu0
      %v804 = vadd.f32 %v533, %v803
      %v805 = vpop.f32.mrb[0].mxu0
      %806 = vmatprep.mubr.bf16.mxu0 0
      %807 = vmatmul.mubr.bf16.gmra.mrb[0].mxu0 %v662
      %v808 = vpop.f32.mrb[0].mxu0
      %v809 = vadd.f32 %v533, %v808
      %v810 = vpop.f32.mrb[0].mxu0
      %v811 = vpop.f32.mrb[0].mxu0
      %v812 = vadd.f32 %v533, %v811
      %v813 = vpop.f32.mrb[0].mxu0
      %814 = vmatprep.mubr.bf16.mxu0 0
      %815 = vmatmul.mubr.bf16.gmra.mrb[0].mxu0 %v665
      %v816 = vpop.f32.mrb[0].mxu0
      %v817 = vadd.f32 %v533, %v816
      %v818 = vpop.f32.mrb[0].mxu0
      %v819 = vpop.f32.mrb[0].mxu0
      %v820 = vadd.f32 %v533, %v819
      %v821 = vpop.f32.mrb[0].mxu0
      %822 = vmatprep.mubr.bf16.mxu0 0
      %823 = vmatmul.mubr.bf16.gmra.mrb[0].mxu0 %v668
      %v824 = vpop.f32.mrb[0].mxu0
      %v825 = vadd.f32 %v533, %v824
      %v826 = vpop.f32.mrb[0].mxu0
      %v827 = vpop.f32.mrb[0].mxu0
      %v828 = vadd.f32 %v533, %v827
      %v829 = vpop.f32.mrb[0].mxu0
      %830 = vdwg.mxu0
      %v831 = vmax.f32 %v705, 0.0
      %v832 = vmax.f32 %v708, 0.0
      %v833 = vmax.f32 %v713, 0.0
      %v834 = vmax.f32 %v716, 0.0
      %v835 = vmax.f32 %v721, 0.0
      %v836 = vmax.f32 %v724, 0.0
      %v837 = vmax.f32 %v729, 0.0
      %v838 = vmax.f32 %v732, 0.0
      %v839 = vmax.f32 %v737, 0.0
      %v840 = vmax.f32 %v740, 0.0
      %v841 = vmax.f32 %v745, 0.0
      %v842 = vmax.f32 %v748, 0.0
      %v843 = vmax.f32 %v753, 0.0
      %v844 = vmax.f32 %v756, 0.0
      %v845 = vmax.f32 %v761, 0.0
      %v846 = vmax.f32 %v764, 0.0
      %v847 = vmax.f32 %v769, 0.0
      %v848 = vmax.f32 %v772, 0.0
      %v849 = vmax.f32 %v777, 0.0
      %v850 = vmax.f32 %v780, 0.0
      %v851 = vmax.f32 %v785, 0.0
      %v852 = vmax.f32 %v788, 0.0
      %v853 = vmax.f32 %v793, 0.0
      %v854 = vmax.f32 %v796, 0.0
      %v855 = vmax.f32 %v801, 0.0
      %v856 = vmax.f32 %v804, 0.0
      %v857 = vmax.f32 %v809, 0.0
      %v858 = vmax.f32 %v812, 0.0
      %v859 = vmax.f32 %v817, 0.0
      %v860 = vmax.f32 %v820, 0.0
      %v861 = vmax.f32 %v825, 0.0
      %v862 = vmax.f32 %v828, 0.0
      %v863 = vpack.c.bf16 %v832, %v831
      %v864 = vpack.c.bf16 %v834, %v833
      %v865 = vpack.c.bf16 %v836, %v835
      %v866 = vpack.c.bf16 %v838, %v837
      %v867 = vpack.c.bf16 %v840, %v839
      %v868 = vpack.c.bf16 %v842, %v841
      %v869 = vpack.c.bf16 %v844, %v843
      %v870 = vpack.c.bf16 %v846, %v845
      %v871 = vpack.c.bf16 %v848, %v847
      %v872 = vpack.c.bf16 %v850, %v849
      %v873 = vpack.c.bf16 %v852, %v851
      %v874 = vpack.c.bf16 %v854, %v853
      %v875 = vpack.c.bf16 %v856, %v855
      %v876 = vpack.c.bf16 %v858, %v857
      %v877 = vpack.c.bf16 %v860, %v859
      %v878 = vpack.c.bf16 %v862, %v861
      %v879 = vld [vmem:[%s4] sm:$0xf]
      %v880 = vld [vmem:[%s4 + $0x4] sm:$0xf]
      %v881 = vld [vmem:[%s4 + $0x8] sm:$0xf]
      %v882 = vld [vmem:[%s4 + $0xc] sm:$0xf]
      %v883 = vld [vmem:[%s5] sm:$0x1]
      %v885 = vlaneseq
      %v886 = vshrl.u32 %v885, 7
      %v887 = vsub.s32 0, %v886
      %v888 = vrot.slane %v883, %v887
      %v894 = vunpack.c.l.b16 %v879
      %v895 = vunpack.c.l.b16 %v880
      %v896 = vunpack.c.l.b16 %v881
      %v897 = vunpack.c.l.b16 %v882
      %v898 = vpack.c.b16 %v895, %v894
      %v899 = vpack.c.b16 %v897, %v896
      %vm902 = vcmask 261120
      %v904 = vsel %vm902, %v863, 0
      %v907 = vsel %vm902, %v864, 0
      %v910 = vsel %vm902, %v865, 0
      %v913 = vsel %vm902, %v866, 0
      %v916 = vsel %vm902, %v867, 0
      %v919 = vsel %vm902, %v868, 0
      %v922 = vsel %vm902, %v869, 0
      %v925 = vsel %vm902, %v870, 0
      %v928 = vsel %vm902, %v871, 0
      %v931 = vsel %vm902, %v872, 0
      %v934 = vsel %vm902, %v873, 0
      %v937 = vsel %vm902, %v874, 0
      %v940 = vsel %vm902, %v875, 0
      %v943 = vsel %vm902, %v876, 0
      %v946 = vsel %vm902, %v877, 0
      %v949 = vsel %vm902, %v878, 0
      %951 = vmatprep.subr.bf16.mxu0 0
      %952 = vmatpush1.bf16.msra.mxu0 %v898
      %953 = vmatprep.subr.bf16.mxu0 0
      %954 = vmatpush1.bf16.msra.mxu0 %v899
      %955 = vmatprep.subr.bf16.mxu0 0
      %956 = vmatpush1.bf16.msra.mxu0 0
      %957 = vmatprep.subr.bf16.mxu0 0
      %958 = vmatpush1.bf16.msra.mxu0 0
      %959 = vmatprep.subr.bf16.mxu0 0
      %960 = vmatpush1.bf16.msra.mxu0 0
      %961 = vmatprep.subr.bf16.mxu0 0
      %962 = vmatpush1.bf16.msra.mxu0 0
      %963 = vmatprep.subr.bf16.mxu0 0
      %964 = vmatpush1.bf16.msra.mxu0 0
      %965 = vmatprep.subr.bf16.mxu0 0
      %966 = vmatpush1.bf16.msra.mxu0 0
      %967 = vmatprep.subr.bf16.mxu0 0
      %968 = vmatpush1.bf16.msra.mxu0 0
      %969 = vmatprep.subr.bf16.mxu0 0
      %970 = vmatpush1.bf16.msra.mxu0 0
      %971 = vmatprep.subr.bf16.mxu0 0
      %972 = vmatpush1.bf16.msra.mxu0 0
      %973 = vmatprep.subr.bf16.mxu0 0
      %974 = vmatpush1.bf16.msra.mxu0 0
      %975 = vmatprep.subr.bf16.mxu0 0
      %976 = vmatpush1.bf16.msra.mxu0 0
      %977 = vmatprep.subr.bf16.mxu0 0
      %978 = vmatpush1.bf16.msra.mxu0 0
      %979 = vmatprep.subr.bf16.mxu0 0
      %980 = vmatpush1.bf16.msra.mxu0 0
      %981 = vmatprep.subr.bf16.mxu0 0
      %982 = vmatpush1.bf16.msra.mxu0 0
      %983 = vmatprep.mubr.bf16.mxu0 0
      %984 = vmatmul.mubr.bf16.gmra.mrb[0].mxu0 %v904
      %v985 = vpop.f32.mrb[0].mxu0
      %v986 = vadd.f32 %v888, %v985
      %v987 = vpop.f32.mrb[0].mxu0
      %v988 = vpop.f32.mrb[0].mxu0
      %v989 = vadd.f32 %v888, %v988
      %v990 = vpop.f32.mrb[0].mxu0
      %991 = vmatprep.mubr.bf16.mxu0 0
      %992 = vmatmul.mubr.bf16.gmra.mrb[0].mxu0 %v907
      %v993 = vpop.f32.mrb[0].mxu0
      %v994 = vadd.f32 %v888, %v993
      %v995 = vpop.f32.mrb[0].mxu0
      %v996 = vpop.f32.mrb[0].mxu0
      %v997 = vadd.f32 %v888, %v996
      %v998 = vpop.f32.mrb[0].mxu0
      %999 = vmatprep.mubr.bf16.mxu0 0
      %1000 = vmatmul.mubr.bf16.gmra.mrb[0].mxu0 %v910
      %v1001 = vpop.f32.mrb[0].mxu0
      %v1002 = vadd.f32 %v888, %v1001
      %v1003 = vpop.f32.mrb[0].mxu0
      %v1004 = vpop.f32.mrb[0].mxu0
      %v1005 = vadd.f32 %v888, %v1004
      %v1006 = vpop.f32.mrb[0].mxu0
      %1007 = vmatprep.mubr.bf16.mxu0 0
      %1008 = vmatmul.mubr.bf16.gmra.mrb[0].mxu0 %v913
      %v1009 = vpop.f32.mrb[0].mxu0
      %v1010 = vadd.f32 %v888, %v1009
      %v1011 = vpop.f32.mrb[0].mxu0
      %v1012 = vpop.f32.mrb[0].mxu0
      %v1013 = vadd.f32 %v888, %v1012
      %v1014 = vpop.f32.mrb[0].mxu0
      %1015 = vmatprep.mubr.bf16.mxu0 0
      %1016 = vmatmul.mubr.bf16.gmra.mrb[0].mxu0 %v916
      %v1017 = vpop.f32.mrb[0].mxu0
      %v1018 = vadd.f32 %v888, %v1017
      %v1019 = vpop.f32.mrb[0].mxu0
      %v1020 = vpop.f32.mrb[0].mxu0
      %v1021 = vadd.f32 %v888, %v1020
      %v1022 = vpop.f32.mrb[0].mxu0
      %1023 = vmatprep.mubr.bf16.mxu0 0
      %1024 = vmatmul.mubr.bf16.gmra.mrb[0].mxu0 %v919
      %v1025 = vpop.f32.mrb[0].mxu0
      %v1026 = vadd.f32 %v888, %v1025
      %v1027 = vpop.f32.mrb[0].mxu0
      %v1028 = vpop.f32.mrb[0].mxu0
      %v1029 = vadd.f32 %v888, %v1028
      %v1030 = vpop.f32.mrb[0].mxu0
      %1031 = vmatprep.mubr.bf16.mxu0 0
      %1032 = vmatmul.mubr.bf16.gmra.mrb[0].mxu0 %v922
      %v1033 = vpop.f32.mrb[0].mxu0
      %v1034 = vadd.f32 %v888, %v1033
      %v1035 = vpop.f32.mrb[0].mxu0
      %v1036 = vpop.f32.mrb[0].mxu0
      %v1037 = vadd.f32 %v888, %v1036
      %v1038 = vpop.f32.mrb[0].mxu0
      %1039 = vmatprep.mubr.bf16.mxu0 0
      %1040 = vmatmul.mubr.bf16.gmra.mrb[0].mxu0 %v925
      %v1041 = vpop.f32.mrb[0].mxu0
      %v1042 = vadd.f32 %v888, %v1041
      %v1043 = vpop.f32.mrb[0].mxu0
      %v1044 = vpop.f32.mrb[0].mxu0
      %v1045 = vadd.f32 %v888, %v1044
      %v1046 = vpop.f32.mrb[0].mxu0
      %1047 = vmatprep.mubr.bf16.mxu0 0
      %1048 = vmatmul.mubr.bf16.gmra.mrb[0].mxu0 %v928
      %v1049 = vpop.f32.mrb[0].mxu0
      %v1050 = vadd.f32 %v888, %v1049
      %v1051 = vpop.f32.mrb[0].mxu0
      %v1052 = vpop.f32.mrb[0].mxu0
      %v1053 = vadd.f32 %v888, %v1052
      %v1054 = vpop.f32.mrb[0].mxu0
      %1055 = vmatprep.mubr.bf16.mxu0 0
      %1056 = vmatmul.mubr.bf16.gmra.mrb[0].mxu0 %v931
      %v1057 = vpop.f32.mrb[0].mxu0
      %v1058 = vadd.f32 %v888, %v1057
      %v1059 = vpop.f32.mrb[0].mxu0
      %v1060 = vpop.f32.mrb[0].mxu0
      %v1061 = vadd.f32 %v888, %v1060
      %v1062 = vpop.f32.mrb[0].mxu0
      %1063 = vmatprep.mubr.bf16.mxu0 0
      %1064 = vmatmul.mubr.bf16.gmra.mrb[0].mxu0 %v934
      %v1065 = vpop.f32.mrb[0].mxu0
      %v1066 = vadd.f32 %v888, %v1065
      %v1067 = vpop.f32.mrb[0].mxu0
      %v1068 = vpop.f32.mrb[0].mxu0
      %v1069 = vadd.f32 %v888, %v1068
      %v1070 = vpop.f32.mrb[0].mxu0
      %1071 = vmatprep.mubr.bf16.mxu0 0
      %1072 = vmatmul.mubr.bf16.gmra.mrb[0].mxu0 %v937
      %v1073 = vpop.f32.mrb[0].mxu0
      %v1074 = vadd.f32 %v888, %v1073
      %v1075 = vpop.f32.mrb[0].mxu0
      %v1076 = vpop.f32.mrb[0].mxu0
      %v1077 = vadd.f32 %v888, %v1076
      %v1078 = vpop.f32.mrb[0].mxu0
      %1079 = vmatprep.mubr.bf16.mxu0 0
      %1080 = vmatmul.mubr.bf16.gmra.mrb[0].mxu0 %v940
      %v1081 = vpop.f32.mrb[0].mxu0
      %v1082 = vadd.f32 %v888, %v1081
      %v1083 = vpop.f32.mrb[0].mxu0
      %v1084 = vpop.f32.mrb[0].mxu0
      %v1085 = vadd.f32 %v888, %v1084
      %v1086 = vpop.f32.mrb[0].mxu0
      %1087 = vmatprep.mubr.bf16.mxu0 0
      %1088 = vmatmul.mubr.bf16.gmra.mrb[0].mxu0 %v943
      %v1089 = vpop.f32.mrb[0].mxu0
      %v1090 = vadd.f32 %v888, %v1089
      %v1091 = vpop.f32.mrb[0].mxu0
      %v1092 = vpop.f32.mrb[0].mxu0
      %v1093 = vadd.f32 %v888, %v1092
      %v1094 = vpop.f32.mrb[0].mxu0
      %1095 = vmatprep.mubr.bf16.mxu0 0
      %1096 = vmatmul.mubr.bf16.gmra.mrb[0].mxu0 %v946
      %v1097 = vpop.f32.mrb[0].mxu0
      %v1098 = vadd.f32 %v888, %v1097
      %v1099 = vpop.f32.mrb[0].mxu0
      %v1100 = vpop.f32.mrb[0].mxu0
      %v1101 = vadd.f32 %v888, %v1100
      %v1102 = vpop.f32.mrb[0].mxu0
      %1103 = vmatprep.mubr.bf16.mxu0 0
      %1104 = vmatmul.mubr.bf16.gmra.mrb[0].mxu0 %v949
      %v1105 = vpop.f32.mrb[0].mxu0
      %v1106 = vadd.f32 %v888, %v1105
      %v1107 = vpop.f32.mrb[0].mxu0
      %v1108 = vpop.f32.mrb[0].mxu0
      %v1109 = vadd.f32 %v888, %v1108
      %v1110 = vpop.f32.mrb[0].mxu0
      %1111 = vdwg.mxu0
      %v1112 = vmax.f32 %v986, 0.0
      %v1113 = vmax.f32 %v989, 0.0
      %v1114 = vmax.f32 %v994, 0.0
      %v1115 = vmax.f32 %v997, 0.0
      %v1116 = vmax.f32 %v1002, 0.0
      %v1117 = vmax.f32 %v1005, 0.0
      %v1118 = vmax.f32 %v1010, 0.0
      %v1119 = vmax.f32 %v1013, 0.0
      %v1120 = vmax.f32 %v1018, 0.0
      %v1121 = vmax.f32 %v1021, 0.0
      %v1122 = vmax.f32 %v1026, 0.0
      %v1123 = vmax.f32 %v1029, 0.0
      %v1124 = vmax.f32 %v1034, 0.0
      %v1125 = vmax.f32 %v1037, 0.0
      %v1126 = vmax.f32 %v1042, 0.0
      %v1127 = vmax.f32 %v1045, 0.0
      %v1128 = vmax.f32 %v1050, 0.0
      %v1129 = vmax.f32 %v1053, 0.0
      %v1130 = vmax.f32 %v1058, 0.0
      %v1131 = vmax.f32 %v1061, 0.0
      %v1132 = vmax.f32 %v1066, 0.0
      %v1133 = vmax.f32 %v1069, 0.0
      %v1134 = vmax.f32 %v1074, 0.0
      %v1135 = vmax.f32 %v1077, 0.0
      %v1136 = vmax.f32 %v1082, 0.0
      %v1137 = vmax.f32 %v1085, 0.0
      %v1138 = vmax.f32 %v1090, 0.0
      %v1139 = vmax.f32 %v1093, 0.0
      %v1140 = vmax.f32 %v1098, 0.0
      %v1141 = vmax.f32 %v1101, 0.0
      %v1142 = vmax.f32 %v1106, 0.0
      %v1143 = vmax.f32 %v1109, 0.0
      %v1144 = vpack.c.bf16 %v1113, %v1112
      %v1145 = vpack.c.bf16 %v1115, %v1114
      %v1146 = vpack.c.bf16 %v1117, %v1116
      %v1147 = vpack.c.bf16 %v1119, %v1118
      %v1148 = vpack.c.bf16 %v1121, %v1120
      %v1149 = vpack.c.bf16 %v1123, %v1122
      %v1150 = vpack.c.bf16 %v1125, %v1124
      %v1151 = vpack.c.bf16 %v1127, %v1126
      %v1152 = vpack.c.bf16 %v1129, %v1128
      %v1153 = vpack.c.bf16 %v1131, %v1130
      %v1154 = vpack.c.bf16 %v1133, %v1132
      %v1155 = vpack.c.bf16 %v1135, %v1134
      %v1156 = vpack.c.bf16 %v1137, %v1136
      %v1157 = vpack.c.bf16 %v1139, %v1138
      %v1158 = vpack.c.bf16 %v1141, %v1140
      %v1159 = vpack.c.bf16 %v1143, %v1142
      %v1160 = vld [vmem:[%s6] sm:$0xf]
      %v1161 = vld [vmem:[%s6 + $0x4] sm:$0xf]
      %v1162 = vld [vmem:[%s6 + $0x8] sm:$0xf]
      %v1163 = vld [vmem:[%s6 + $0xc] sm:$0xf]
      %v1164 = vld [vmem:[%s7] sm:$0x1]
      %v1166 = vlaneseq
      %v1167 = vshrl.u32 %v1166, 7
      %v1168 = vsub.s32 0, %v1167
      %v1169 = vrot.slane %v1164, %v1168
      %v1175 = vunpack.c.l.b16 %v1160
      %v1176 = vunpack.c.l.b16 %v1161
      %v1177 = vunpack.c.l.b16 %v1162
      %v1178 = vunpack.c.l.b16 %v1163
      %v1179 = vpack.c.b16 %v1176, %v1175
      %v1180 = vpack.c.b16 %v1178, %v1177
      %v1184 = vsel %vm902, %v1144, 0
      %v1187 = vsel %vm902, %v1145, 0
      %v1190 = vsel %vm902, %v1146, 0
      %v1193 = vsel %vm902, %v1147, 0
      %v1196 = vsel %vm902, %v1148, 0
      %v1199 = vsel %vm902, %v1149, 0
      %v1202 = vsel %vm902, %v1150, 0
      %v1205 = vsel %vm902, %v1151, 0
      %v1208 = vsel %vm902, %v1152, 0
      %v1211 = vsel %vm902, %v1153, 0
      %v1214 = vsel %vm902, %v1154, 0
      %v1217 = vsel %vm902, %v1155, 0
      %v1220 = vsel %vm902, %v1156, 0
      %v1223 = vsel %vm902, %v1157, 0
      %v1226 = vsel %vm902, %v1158, 0
      %v1229 = vsel %vm902, %v1159, 0
      %1231 = vmatprep.subr.bf16.mxu0 0
      %1232 = vmatpush1.bf16.msra.mxu0 %v1179
      %1233 = vmatprep.subr.bf16.mxu0 0
      %1234 = vmatpush1.bf16.msra.mxu0 %v1180
      %1235 = vmatprep.subr.bf16.mxu0 0
      %1236 = vmatpush1.bf16.msra.mxu0 0
      %1237 = vmatprep.subr.bf16.mxu0 0
      %1238 = vmatpush1.bf16.msra.mxu0 0
      %1239 = vmatprep.subr.bf16.mxu0 0
      %1240 = vmatpush1.bf16.msra.mxu0 0
      %1241 = vmatprep.subr.bf16.mxu0 0
      %1242 = vmatpush1.bf16.msra.mxu0 0
      %1243 = vmatprep.subr.bf16.mxu0 0
      %1244 = vmatpush1.bf16.msra.mxu0 0
      %1245 = vmatprep.subr.bf16.mxu0 0
      %1246 = vmatpush1.bf16.msra.mxu0 0
      %1247 = vmatprep.subr.bf16.mxu0 0
      %1248 = vmatpush1.bf16.msra.mxu0 0
      %1249 = vmatprep.subr.bf16.mxu0 0
      %1250 = vmatpush1.bf16.msra.mxu0 0
      %1251 = vmatprep.subr.bf16.mxu0 0
      %1252 = vmatpush1.bf16.msra.mxu0 0
      %1253 = vmatprep.subr.bf16.mxu0 0
      %1254 = vmatpush1.bf16.msra.mxu0 0
      %1255 = vmatprep.subr.bf16.mxu0 0
      %1256 = vmatpush1.bf16.msra.mxu0 0
      %1257 = vmatprep.subr.bf16.mxu0 0
      %1258 = vmatpush1.bf16.msra.mxu0 0
      %1259 = vmatprep.subr.bf16.mxu0 0
      %1260 = vmatpush1.bf16.msra.mxu0 0
      %1261 = vmatprep.subr.bf16.mxu0 0
      %1262 = vmatpush1.bf16.msra.mxu0 0
      %1263 = vmatprep.mubr.bf16.mxu0 0
      %1264 = vmatmul.mubr.bf16.gmra.mrb[0].mxu0 %v1184
      %v1265 = vpop.f32.mrb[0].mxu0
      %v1266 = vadd.f32 %v1169, %v1265
      %v1267 = vpop.f32.mrb[0].mxu0
      %v1268 = vpop.f32.mrb[0].mxu0
      %v1269 = vadd.f32 %v1169, %v1268
      %v1270 = vpop.f32.mrb[0].mxu0
      %1271 = vmatprep.mubr.bf16.mxu0 0
      %1272 = vmatmul.mubr.bf16.gmra.mrb[0].mxu0 %v1187
      %v1273 = vpop.f32.mrb[0].mxu0
      %v1274 = vadd.f32 %v1169, %v1273
      %v1275 = vpop.f32.mrb[0].mxu0
      %v1276 = vpop.f32.mrb[0].mxu0
      %v1277 = vadd.f32 %v1169, %v1276
      %v1278 = vpop.f32.mrb[0].mxu0
      %1279 = vmatprep.mubr.bf16.mxu0 0
      %1280 = vmatmul.mubr.bf16.gmra.mrb[0].mxu0 %v1190
      %v1281 = vpop.f32.mrb[0].mxu0
      %v1282 = vadd.f32 %v1169, %v1281
      %v1283 = vpop.f32.mrb[0].mxu0
      %v1284 = vpop.f32.mrb[0].mxu0
      %v1285 = vadd.f32 %v1169, %v1284
      %v1286 = vpop.f32.mrb[0].mxu0
      %1287 = vmatprep.mubr.bf16.mxu0 0
      %1288 = vmatmul.mubr.bf16.gmra.mrb[0].mxu0 %v1193
      %v1289 = vpop.f32.mrb[0].mxu0
      %v1290 = vadd.f32 %v1169, %v1289
      %v1291 = vpop.f32.mrb[0].mxu0
      %v1292 = vpop.f32.mrb[0].mxu0
      %v1293 = vadd.f32 %v1169, %v1292
      %v1294 = vpop.f32.mrb[0].mxu0
      %1295 = vmatprep.mubr.bf16.mxu0 0
      %1296 = vmatmul.mubr.bf16.gmra.mrb[0].mxu0 %v1196
      %v1297 = vpop.f32.mrb[0].mxu0
      %v1298 = vadd.f32 %v1169, %v1297
      %v1299 = vpop.f32.mrb[0].mxu0
      %v1300 = vpop.f32.mrb[0].mxu0
      %v1301 = vadd.f32 %v1169, %v1300
      %v1302 = vpop.f32.mrb[0].mxu0
      %1303 = vmatprep.mubr.bf16.mxu0 0
      %1304 = vmatmul.mubr.bf16.gmra.mrb[0].mxu0 %v1199
      %v1305 = vpop.f32.mrb[0].mxu0
      %v1306 = vadd.f32 %v1169, %v1305
      %v1307 = vpop.f32.mrb[0].mxu0
      %v1308 = vpop.f32.mrb[0].mxu0
      %v1309 = vadd.f32 %v1169, %v1308
      %v1310 = vpop.f32.mrb[0].mxu0
      %1311 = vmatprep.mubr.bf16.mxu0 0
      %1312 = vmatmul.mubr.bf16.gmra.mrb[0].mxu0 %v1202
      %v1313 = vpop.f32.mrb[0].mxu0
      %v1314 = vadd.f32 %v1169, %v1313
      %v1315 = vpop.f32.mrb[0].mxu0
      %v1316 = vpop.f32.mrb[0].mxu0
      %v1317 = vadd.f32 %v1169, %v1316
      %v1318 = vpop.f32.mrb[0].mxu0
      %1319 = vmatprep.mubr.bf16.mxu0 0
      %1320 = vmatmul.mubr.bf16.gmra.mrb[0].mxu0 %v1205
      %v1321 = vpop.f32.mrb[0].mxu0
      %v1322 = vadd.f32 %v1169, %v1321
      %v1323 = vpop.f32.mrb[0].mxu0
      %v1324 = vpop.f32.mrb[0].mxu0
      %v1325 = vadd.f32 %v1169, %v1324
      %v1326 = vpop.f32.mrb[0].mxu0
      %1327 = vmatprep.mubr.bf16.mxu0 0
      %1328 = vmatmul.mubr.bf16.gmra.mrb[0].mxu0 %v1208
      %v1329 = vpop.f32.mrb[0].mxu0
      %v1330 = vadd.f32 %v1169, %v1329
      %v1331 = vpop.f32.mrb[0].mxu0
      %v1332 = vpop.f32.mrb[0].mxu0
      %v1333 = vadd.f32 %v1169, %v1332
      %v1334 = vpop.f32.mrb[0].mxu0
      %1335 = vmatprep.mubr.bf16.mxu0 0
      %1336 = vmatmul.mubr.bf16.gmra.mrb[0].mxu0 %v1211
      %v1337 = vpop.f32.mrb[0].mxu0
      %v1338 = vadd.f32 %v1169, %v1337
      %v1339 = vpop.f32.mrb[0].mxu0
      %v1340 = vpop.f32.mrb[0].mxu0
      %v1341 = vadd.f32 %v1169, %v1340
      %v1342 = vpop.f32.mrb[0].mxu0
      %1343 = vmatprep.mubr.bf16.mxu0 0
      %1344 = vmatmul.mubr.bf16.gmra.mrb[0].mxu0 %v1214
      %v1345 = vpop.f32.mrb[0].mxu0
      %v1346 = vadd.f32 %v1169, %v1345
      %v1347 = vpop.f32.mrb[0].mxu0
      %v1348 = vpop.f32.mrb[0].mxu0
      %v1349 = vadd.f32 %v1169, %v1348
      %v1350 = vpop.f32.mrb[0].mxu0
      %1351 = vmatprep.mubr.bf16.mxu0 0
      %1352 = vmatmul.mubr.bf16.gmra.mrb[0].mxu0 %v1217
      %v1353 = vpop.f32.mrb[0].mxu0
      %v1354 = vadd.f32 %v1169, %v1353
      %v1355 = vpop.f32.mrb[0].mxu0
      %v1356 = vpop.f32.mrb[0].mxu0
      %v1357 = vadd.f32 %v1169, %v1356
      %v1358 = vpop.f32.mrb[0].mxu0
      %1359 = vmatprep.mubr.bf16.mxu0 0
      %1360 = vmatmul.mubr.bf16.gmra.mrb[0].mxu0 %v1220
      %v1361 = vpop.f32.mrb[0].mxu0
      %v1362 = vadd.f32 %v1169, %v1361
      %v1363 = vpop.f32.mrb[0].mxu0
      %v1364 = vpop.f32.mrb[0].mxu0
      %v1365 = vadd.f32 %v1169, %v1364
      %v1366 = vpop.f32.mrb[0].mxu0
      %1367 = vmatprep.mubr.bf16.mxu0 0
      %1368 = vmatmul.mubr.bf16.gmra.mrb[0].mxu0 %v1223
      %v1369 = vpop.f32.mrb[0].mxu0
      %v1370 = vadd.f32 %v1169, %v1369
      %v1371 = vpop.f32.mrb[0].mxu0
      %v1372 = vpop.f32.mrb[0].mxu0
      %v1373 = vadd.f32 %v1169, %v1372
      %v1374 = vpop.f32.mrb[0].mxu0
      %1375 = vmatprep.mubr.bf16.mxu0 0
      %1376 = vmatmul.mubr.bf16.gmra.mrb[0].mxu0 %v1226
      %v1377 = vpop.f32.mrb[0].mxu0
      %v1378 = vadd.f32 %v1169, %v1377
      %v1379 = vpop.f32.mrb[0].mxu0
      %v1380 = vpop.f32.mrb[0].mxu0
      %v1381 = vadd.f32 %v1169, %v1380
      %v1382 = vpop.f32.mrb[0].mxu0
      %1383 = vmatprep.mubr.bf16.mxu0 0
      %1384 = vmatmul.mubr.bf16.gmra.mrb[0].mxu0 %v1229
      %v1385 = vpop.f32.mrb[0].mxu0
      %v1386 = vadd.f32 %v1169, %v1385
      %v1387 = vpop.f32.mrb[0].mxu0
      %v1388 = vpop.f32.mrb[0].mxu0
      %v1389 = vadd.f32 %v1169, %v1388
      %v1390 = vpop.f32.mrb[0].mxu0
      %1391 = vdwg.mxu0
      %v1392 = vmax.f32 %v1266, -4.0
      %v1393 = vmax.f32 %v1269, -4.0
      %v1394 = vmax.f32 %v1274, -4.0
      %v1395 = vmax.f32 %v1277, -4.0
      %v1396 = vmax.f32 %v1282, -4.0
      %v1397 = vmax.f32 %v1285, -4.0
      %v1398 = vmax.f32 %v1290, -4.0
      %v1399 = vmax.f32 %v1293, -4.0
      %v1400 = vmax.f32 %v1298, -4.0
      %v1401 = vmax.f32 %v1301, -4.0
      %v1402 = vmax.f32 %v1306, -4.0
      %v1403 = vmax.f32 %v1309, -4.0
      %v1404 = vmax.f32 %v1314, -4.0
      %v1405 = vmax.f32 %v1317, -4.0
      %v1406 = vmax.f32 %v1322, -4.0
      %v1407 = vmax.f32 %v1325, -4.0
      %v1408 = vmax.f32 %v1330, -4.0
      %v1409 = vmax.f32 %v1333, -4.0
      %v1410 = vmax.f32 %v1338, -4.0
      %v1411 = vmax.f32 %v1341, -4.0
      %v1412 = vmax.f32 %v1346, -4.0
      %v1413 = vmax.f32 %v1349, -4.0
      %v1414 = vmax.f32 %v1354, -4.0
      %v1415 = vmax.f32 %v1357, -4.0
      %v1416 = vmax.f32 %v1362, -4.0
      %v1417 = vmax.f32 %v1365, -4.0
      %v1418 = vmax.f32 %v1370, -4.0
      %v1419 = vmax.f32 %v1373, -4.0
      %v1420 = vmax.f32 %v1378, -4.0
      %v1421 = vmax.f32 %v1381, -4.0
      %v1422 = vmax.f32 %v1386, -4.0
      %v1423 = vmax.f32 %v1389, -4.0
      %v1424 = vmin.f32 %v1392, 15.0
      %v1425 = vmin.f32 %v1393, 15.0
      %v1426 = vmin.f32 %v1394, 15.0
      %v1427 = vmin.f32 %v1395, 15.0
      %v1428 = vmin.f32 %v1396, 15.0
      %v1429 = vmin.f32 %v1397, 15.0
      %v1430 = vmin.f32 %v1398, 15.0
      %v1431 = vmin.f32 %v1399, 15.0
      %v1432 = vmin.f32 %v1400, 15.0
      %v1433 = vmin.f32 %v1401, 15.0
      %v1434 = vmin.f32 %v1402, 15.0
      %v1435 = vmin.f32 %v1403, 15.0
      %v1436 = vmin.f32 %v1404, 15.0
      %v1437 = vmin.f32 %v1405, 15.0
      %v1438 = vmin.f32 %v1406, 15.0
      %v1439 = vmin.f32 %v1407, 15.0
      %v1440 = vmin.f32 %v1408, 15.0
      %v1441 = vmin.f32 %v1409, 15.0
      %v1442 = vmin.f32 %v1410, 15.0
      %v1443 = vmin.f32 %v1411, 15.0
      %v1444 = vmin.f32 %v1412, 15.0
      %v1445 = vmin.f32 %v1413, 15.0
      %v1446 = vmin.f32 %v1414, 15.0
      %v1447 = vmin.f32 %v1415, 15.0
      %v1448 = vmin.f32 %v1416, 15.0
      %v1449 = vmin.f32 %v1417, 15.0
      %v1450 = vmin.f32 %v1418, 15.0
      %v1451 = vmin.f32 %v1419, 15.0
      %v1452 = vmin.f32 %v1420, 15.0
      %v1453 = vmin.f32 %v1421, 15.0
      %v1454 = vmin.f32 %v1422, 15.0
      %v1455 = vmin.f32 %v1423, 15.0
      %v1456 = vmul.f32 %v1424, 1.442695
      %v1457 = vpow.pop %v1456
      %v1458 = vmul.f32 %v1425, 1.442695
      %v1459 = vpow.pop %v1458
      %v1460 = vmul.f32 %v1426, 1.442695
      %v1461 = vpow.pop %v1460
      %v1462 = vmul.f32 %v1427, 1.442695
      %v1463 = vpow.pop %v1462
      %v1464 = vmul.f32 %v1428, 1.442695
      %v1465 = vpow.pop %v1464
      %v1466 = vmul.f32 %v1429, 1.442695
      %v1467 = vpow.pop %v1466
      %v1468 = vmul.f32 %v1430, 1.442695
      %v1469 = vpow.pop %v1468
      %v1470 = vmul.f32 %v1431, 1.442695
      %v1471 = vpow.pop %v1470
      %v1472 = vmul.f32 %v1432, 1.442695
      %v1473 = vpow.pop %v1472
      %v1474 = vmul.f32 %v1433, 1.442695
      %v1475 = vpow.pop %v1474
      %v1476 = vmul.f32 %v1434, 1.442695
      %v1477 = vpow.pop %v1476
      %v1478 = vmul.f32 %v1435, 1.442695
      %v1479 = vpow.pop %v1478
      %v1480 = vmul.f32 %v1436, 1.442695
      %v1481 = vpow.pop %v1480
      %v1482 = vmul.f32 %v1437, 1.442695
      %v1483 = vpow.pop %v1482
      %v1484 = vmul.f32 %v1438, 1.442695
      %v1485 = vpow.pop %v1484
      %v1486 = vmul.f32 %v1439, 1.442695
      %v1487 = vpow.pop %v1486
      %v1488 = vmul.f32 %v1440, 1.442695
      %v1489 = vpow.pop %v1488
      %v1490 = vmul.f32 %v1441, 1.442695
      %v1491 = vpow.pop %v1490
      %v1492 = vmul.f32 %v1442, 1.442695
      %v1493 = vpow.pop %v1492
      %v1494 = vmul.f32 %v1443, 1.442695
      %v1495 = vpow.pop %v1494
      %v1496 = vmul.f32 %v1444, 1.442695
      %v1497 = vpow.pop %v1496
      %v1498 = vmul.f32 %v1445, 1.442695
      %v1499 = vpow.pop %v1498
      %v1500 = vmul.f32 %v1446, 1.442695
      %v1501 = vpow.pop %v1500
      %v1502 = vmul.f32 %v1447, 1.442695
      %v1503 = vpow.pop %v1502
      %v1504 = vmul.f32 %v1448, 1.442695
      %v1505 = vpow.pop %v1504
      %v1506 = vmul.f32 %v1449, 1.442695
      %v1507 = vpow.pop %v1506
      %v1508 = vmul.f32 %v1450, 1.442695
      %v1509 = vpow.pop %v1508
      %v1510 = vmul.f32 %v1451, 1.442695
      %v1511 = vpow.pop %v1510
      %v1512 = vmul.f32 %v1452, 1.442695
      %v1513 = vpow.pop %v1512
      %v1514 = vmul.f32 %v1453, 1.442695
      %v1515 = vpow.pop %v1514
      %v1516 = vmul.f32 %v1454, 1.442695
      %v1517 = vpow.pop %v1516
      %v1518 = vmul.f32 %v1455, 1.442695
      %v1519 = vpow.pop %v1518
      %v1520 = vld [vmem:[%s485] sm:$0xff]
      %v1521 = vld [vmem:[%s485 + $0x8] sm:$0xff]
      %v1522 = vld [vmem:[%s485 + $0x10] sm:$0xff]
      %v1523 = vld [vmem:[%s485 + $0x18] sm:$0xff]
      %v1524 = vld [vmem:[%s485 + $0x20] sm:$0xff]
      %v1525 = vld [vmem:[%s485 + $0x28] sm:$0xff]
      %v1526 = vld [vmem:[%s485 + $0x30] sm:$0xff]
      %v1527 = vld [vmem:[%s485 + $0x38] sm:$0xff]
      %v1528 = vld [vmem:[%s485 + $0x40] sm:$0xff]
      %v1529 = vld [vmem:[%s485 + $0x48] sm:$0xff]
      %v1530 = vld [vmem:[%s485 + $0x50] sm:$0xff]
      %v1531 = vld [vmem:[%s485 + $0x58] sm:$0xff]
      %v1532 = vld [vmem:[%s485 + $0x60] sm:$0xff]
      %v1533 = vld [vmem:[%s485 + $0x68] sm:$0xff]
      %v1534 = vld [vmem:[%s485 + $0x70] sm:$0xff]
      %v1535 = vld [vmem:[%s485 + $0x78] sm:$0xff]
      %v1536 = vld [vmem:[%s485 + $0x80] sm:$0xff]
      %v1537 = vld [vmem:[%s485 + $0x88] sm:$0xff]
      %v1538 = vld [vmem:[%s485 + $0x90] sm:$0xff]
      %v1539 = vld [vmem:[%s485 + $0x98] sm:$0xff]
      %v1540 = vld [vmem:[%s485 + $0xa0] sm:$0xff]
      %v1541 = vld [vmem:[%s485 + $0xa8] sm:$0xff]
      %v1542 = vld [vmem:[%s485 + $0xb0] sm:$0xff]
      %v1543 = vld [vmem:[%s485 + $0xb8] sm:$0xff]
      %v1544 = vld [vmem:[%s485 + $0xc0] sm:$0xff]
      %v1545 = vld [vmem:[%s485 + $0xc8] sm:$0xff]
      %v1546 = vld [vmem:[%s485 + $0xd0] sm:$0xff]
      %v1547 = vld [vmem:[%s485 + $0xd8] sm:$0xff]
      %v1548 = vld [vmem:[%s485 + $0xe0] sm:$0xff]
      %v1549 = vld [vmem:[%s485 + $0xe8] sm:$0xff]
      %v1550 = vld [vmem:[%s485 + $0xf0] sm:$0xff]
      %v1551 = vld [vmem:[%s485 + $0xf8] sm:$0xff]
      %1584 = vrot.lane.b32.xlu0 %v1520, 8
      %v1585 = vpop.permute.xlu0 %1584
      %1586 = vrot.lane.b32.xlu0 %v1521, 8
      %v1587 = vpop.permute.xlu0 %1586
      %1588 = vrot.lane.b32.xlu0 %v1522, 8
      %v1589 = vpop.permute.xlu0 %1588
      %1590 = vrot.lane.b32.xlu0 %v1523, 8
      %v1591 = vpop.permute.xlu0 %1590
      %1592 = vrot.lane.b32.xlu0 %v1524, 8
      %v1593 = vpop.permute.xlu0 %1592
      %1594 = vrot.lane.b32.xlu0 %v1525, 8
      %v1595 = vpop.permute.xlu0 %1594
      %1596 = vrot.lane.b32.xlu0 %v1526, 8
      %v1597 = vpop.permute.xlu0 %1596
      %1598 = vrot.lane.b32.xlu0 %v1527, 8
      %v1599 = vpop.permute.xlu0 %1598
      %1600 = vrot.lane.b32.xlu0 %v1528, 8
      %v1601 = vpop.permute.xlu0 %1600
      %1602 = vrot.lane.b32.xlu0 %v1529, 8
      %v1603 = vpop.permute.xlu0 %1602
      %1604 = vrot.lane.b32.xlu0 %v1530, 8
      %v1605 = vpop.permute.xlu0 %1604
      %1606 = vrot.lane.b32.xlu0 %v1531, 8
      %v1607 = vpop.permute.xlu0 %1606
      %1608 = vrot.lane.b32.xlu0 %v1532, 8
      %v1609 = vpop.permute.xlu0 %1608
      %1610 = vrot.lane.b32.xlu0 %v1533, 8
      %v1611 = vpop.permute.xlu0 %1610
      %1612 = vrot.lane.b32.xlu0 %v1534, 8
      %v1613 = vpop.permute.xlu0 %1612
      %1614 = vrot.lane.b32.xlu0 %v1535, 8
      %v1615 = vpop.permute.xlu0 %1614
      %1616 = vrot.lane.b32.xlu0 %v1536, 8
      %v1617 = vpop.permute.xlu0 %1616
      %1618 = vrot.lane.b32.xlu0 %v1537, 8
      %v1619 = vpop.permute.xlu0 %1618
      %1620 = vrot.lane.b32.xlu0 %v1538, 8
      %v1621 = vpop.permute.xlu0 %1620
      %1622 = vrot.lane.b32.xlu0 %v1539, 8
      %v1623 = vpop.permute.xlu0 %1622
      %1624 = vrot.lane.b32.xlu0 %v1540, 8
      %v1625 = vpop.permute.xlu0 %1624
      %1626 = vrot.lane.b32.xlu0 %v1541, 8
      %v1627 = vpop.permute.xlu0 %1626
      %1628 = vrot.lane.b32.xlu0 %v1542, 8
      %v1629 = vpop.permute.xlu0 %1628
      %1630 = vrot.lane.b32.xlu0 %v1543, 8
      %v1631 = vpop.permute.xlu0 %1630
      %1632 = vrot.lane.b32.xlu0 %v1544, 8
      %v1633 = vpop.permute.xlu0 %1632
      %1634 = vrot.lane.b32.xlu0 %v1545, 8
      %v1635 = vpop.permute.xlu0 %1634
      %1636 = vrot.lane.b32.xlu0 %v1546, 8
      %v1637 = vpop.permute.xlu0 %1636
      %1638 = vrot.lane.b32.xlu0 %v1547, 8
      %v1639 = vpop.permute.xlu0 %1638
      %1640 = vrot.lane.b32.xlu0 %v1548, 8
      %v1641 = vpop.permute.xlu0 %1640
      %1642 = vrot.lane.b32.xlu0 %v1549, 8
      %v1643 = vpop.permute.xlu0 %1642
      %1644 = vrot.lane.b32.xlu0 %v1550, 8
      %v1645 = vpop.permute.xlu0 %1644
      %1646 = vrot.lane.b32.xlu0 %v1551, 8
      %v1647 = vpop.permute.xlu0 %1646
      %v1680 = vmul.f32 %v1457, %v1585
      %v1681 = vmul.f32 %v1459, %v1587
      %v1682 = vmul.f32 %v1461, %v1589
      %v1683 = vmul.f32 %v1463, %v1591
      %v1684 = vmul.f32 %v1465, %v1593
      %v1685 = vmul.f32 %v1467, %v1595
      %v1686 = vmul.f32 %v1469, %v1597
      %v1687 = vmul.f32 %v1471, %v1599
      %v1688 = vmul.f32 %v1473, %v1601
      %v1689 = vmul.f32 %v1475, %v1603
      %v1690 = vmul.f32 %v1477, %v1605
      %v1691 = vmul.f32 %v1479, %v1607
      %v1692 = vmul.f32 %v1481, %v1609
      %v1693 = vmul.f32 %v1483, %v1611
      %v1694 = vmul.f32 %v1485, %v1613
      %v1695 = vmul.f32 %v1487, %v1615
      %v1696 = vmul.f32 %v1489, %v1617
      %v1697 = vmul.f32 %v1491, %v1619
      %v1698 = vmul.f32 %v1493, %v1621
      %v1699 = vmul.f32 %v1495, %v1623
      %v1700 = vmul.f32 %v1497, %v1625
      %v1701 = vmul.f32 %v1499, %v1627
      %v1702 = vmul.f32 %v1501, %v1629
      %v1703 = vmul.f32 %v1503, %v1631
      %v1704 = vmul.f32 %v1505, %v1633
      %v1705 = vmul.f32 %v1507, %v1635
      %v1706 = vmul.f32 %v1509, %v1637
      %v1707 = vmul.f32 %v1511, %v1639
      %v1708 = vmul.f32 %v1513, %v1641
      %v1709 = vmul.f32 %v1515, %v1643
      %v1710 = vmul.f32 %v1517, %v1645
      %v1711 = vmul.f32 %v1519, %v1647
      %1744 = vrot.lane.b32.xlu0 %v1680, 120
      %v1745 = vpop.permute.xlu0 %1744
      %1746 = vrot.lane.b32.xlu0 %v1681, 120
      %v1747 = vpop.permute.xlu0 %1746
      %1748 = vrot.lane.b32.xlu0 %v1682, 120
      %v1749 = vpop.permute.xlu0 %1748
      %1750 = vrot.lane.b32.xlu0 %v1683, 120
      %v1751 = vpop.permute.xlu0 %1750
      %1752 = vrot.lane.b32.xlu0 %v1684, 120
      %v1753 = vpop.permute.xlu0 %1752
      %1754 = vrot.lane.b32.xlu0 %v1685, 120
      %v1755 = vpop.permute.xlu0 %1754
      %1756 = vrot.lane.b32.xlu0 %v1686, 120
      %v1757 = vpop.permute.xlu0 %1756
      %1758 = vrot.lane.b32.xlu0 %v1687, 120
      %v1759 = vpop.permute.xlu0 %1758
      %1760 = vrot.lane.b32.xlu0 %v1688, 120
      %v1761 = vpop.permute.xlu0 %1760
      %1762 = vrot.lane.b32.xlu0 %v1689, 120
      %v1763 = vpop.permute.xlu0 %1762
      %1764 = vrot.lane.b32.xlu0 %v1690, 120
      %v1765 = vpop.permute.xlu0 %1764
      %1766 = vrot.lane.b32.xlu0 %v1691, 120
      %v1767 = vpop.permute.xlu0 %1766
      %1768 = vrot.lane.b32.xlu0 %v1692, 120
      %v1769 = vpop.permute.xlu0 %1768
      %1770 = vrot.lane.b32.xlu0 %v1693, 120
      %v1771 = vpop.permute.xlu0 %1770
      %1772 = vrot.lane.b32.xlu0 %v1694, 120
      %v1773 = vpop.permute.xlu0 %1772
      %1774 = vrot.lane.b32.xlu0 %v1695, 120
      %v1775 = vpop.permute.xlu0 %1774
      %1776 = vrot.lane.b32.xlu0 %v1696, 120
      %v1777 = vpop.permute.xlu0 %1776
      %1778 = vrot.lane.b32.xlu0 %v1697, 120
      %v1779 = vpop.permute.xlu0 %1778
      %1780 = vrot.lane.b32.xlu0 %v1698, 120
      %v1781 = vpop.permute.xlu0 %1780
      %1782 = vrot.lane.b32.xlu0 %v1699, 120
      %v1783 = vpop.permute.xlu0 %1782
      %1784 = vrot.lane.b32.xlu0 %v1700, 120
      %v1785 = vpop.permute.xlu0 %1784
      %1786 = vrot.lane.b32.xlu0 %v1701, 120
      %v1787 = vpop.permute.xlu0 %1786
      %1788 = vrot.lane.b32.xlu0 %v1702, 120
      %v1789 = vpop.permute.xlu0 %1788
      %1790 = vrot.lane.b32.xlu0 %v1703, 120
      %v1791 = vpop.permute.xlu0 %1790
      %1792 = vrot.lane.b32.xlu0 %v1704, 120
      %v1793 = vpop.permute.xlu0 %1792
      %1794 = vrot.lane.b32.xlu0 %v1705, 120
      %v1795 = vpop.permute.xlu0 %1794
      %1796 = vrot.lane.b32.xlu0 %v1706, 120
      %v1797 = vpop.permute.xlu0 %1796
      %1798 = vrot.lane.b32.xlu0 %v1707, 120
      %v1799 = vpop.permute.xlu0 %1798
      %1800 = vrot.lane.b32.xlu0 %v1708, 120
      %v1801 = vpop.permute.xlu0 %1800
      %1802 = vrot.lane.b32.xlu0 %v1709, 120
      %v1803 = vpop.permute.xlu0 %1802
      %1804 = vrot.lane.b32.xlu0 %v1710, 120
      %v1805 = vpop.permute.xlu0 %1804
      %1806 = vrot.lane.b32.xlu0 %v1711, 120
      %v1807 = vpop.permute.xlu0 %1806
      %v1840 = vadd.f32 %v1266, %v1745
      %v1841 = vadd.f32 %v1269, %v1747
      %v1842 = vadd.f32 %v1274, %v1749
      %v1843 = vadd.f32 %v1277, %v1751
      %v1844 = vadd.f32 %v1282, %v1753
      %v1845 = vadd.f32 %v1285, %v1755
      %v1846 = vadd.f32 %v1290, %v1757
      %v1847 = vadd.f32 %v1293, %v1759
      %v1848 = vadd.f32 %v1298, %v1761
      %v1849 = vadd.f32 %v1301, %v1763
      %v1850 = vadd.f32 %v1306, %v1765
      %v1851 = vadd.f32 %v1309, %v1767
      %v1852 = vadd.f32 %v1314, %v1769
      %v1853 = vadd.f32 %v1317, %v1771
      %v1854 = vadd.f32 %v1322, %v1773
      %v1855 = vadd.f32 %v1325, %v1775
      %v1856 = vadd.f32 %v1330, %v1777
      %v1857 = vadd.f32 %v1333, %v1779
      %v1858 = vadd.f32 %v1338, %v1781
      %v1859 = vadd.f32 %v1341, %v1783
      %v1860 = vadd.f32 %v1346, %v1785
      %v1861 = vadd.f32 %v1349, %v1787
      %v1862 = vadd.f32 %v1354, %v1789
      %v1863 = vadd.f32 %v1357, %v1791
      %v1864 = vadd.f32 %v1362, %v1793
      %v1865 = vadd.f32 %v1365, %v1795
      %v1866 = vadd.f32 %v1370, %v1797
      %v1867 = vadd.f32 %v1373, %v1799
      %v1868 = vadd.f32 %v1378, %v1801
      %v1869 = vadd.f32 %v1381, %v1803
      %v1870 = vadd.f32 %v1386, %v1805
      %v1871 = vadd.f32 %v1389, %v1807
      %v1872 = vpack.c.bf16 %v1841, %v1840
      %v1873 = vpack.c.bf16 %v1843, %v1842
      %v1874 = vpack.c.bf16 %v1845, %v1844
      %v1875 = vpack.c.bf16 %v1847, %v1846
      %v1876 = vpack.c.bf16 %v1849, %v1848
      %v1877 = vpack.c.bf16 %v1851, %v1850
      %v1878 = vpack.c.bf16 %v1853, %v1852
      %v1879 = vpack.c.bf16 %v1855, %v1854
      %v1880 = vpack.c.bf16 %v1857, %v1856
      %v1881 = vpack.c.bf16 %v1859, %v1858
      %v1882 = vpack.c.bf16 %v1861, %v1860
      %v1883 = vpack.c.bf16 %v1863, %v1862
      %v1884 = vpack.c.bf16 %v1865, %v1864
      %v1885 = vpack.c.bf16 %v1867, %v1866
      %v1886 = vpack.c.bf16 %v1869, %v1868
      %v1887 = vpack.c.bf16 %v1871, %v1870
      %v1888 = vld [vmem:[%s8] sm:$0xf]
      %v1889 = vld [vmem:[%s9] sm:$0x1]
      %v1891 = vlaneseq
      %v1892 = vshrl.u32 %v1891, 7
      %v1893 = vsub.s32 0, %v1892
      %v1894 = vrot.slane %v1889, %v1893
      %vm1896 = vcmask 64512
      %v1898 = vsel %vm1896, %v1872, 0
      %v1901 = vsel %vm1896, %v1873, 0
      %v1904 = vsel %vm1896, %v1874, 0
      %v1907 = vsel %vm1896, %v1875, 0
      %v1910 = vsel %vm1896, %v1876, 0
      %v1913 = vsel %vm1896, %v1877, 0
      %v1916 = vsel %vm1896, %v1878, 0
      %v1919 = vsel %vm1896, %v1879, 0
      %v1922 = vsel %vm1896, %v1880, 0
      %v1925 = vsel %vm1896, %v1881, 0
      %v1928 = vsel %vm1896, %v1882, 0
      %v1931 = vsel %vm1896, %v1883, 0
      %v1934 = vsel %vm1896, %v1884, 0
      %v1937 = vsel %vm1896, %v1885, 0
      %v1940 = vsel %vm1896, %v1886, 0
      %v1943 = vsel %vm1896, %v1887, 0
      %vm1945 = vcmask 1043456
      %v1947 = vsel %vm1945, %v1888, 0
      %1949 = vmatprep.subr.bf16.mxu0 0
      %1950 = vmatpush1.bf16.msra.mxu0 %v1947
      %1951 = vmatprep.subr.bf16.mxu0 0
      %1952 = vmatpush1.bf16.msra.mxu0 0
      %1953 = vmatprep.subr.bf16.mxu0 0
      %1954 = vmatpush1.bf16.msra.mxu0 0
      %1955 = vmatprep.subr.bf16.mxu0 0
      %1956 = vmatpush1.bf16.msra.mxu0 0
      %1957 = vmatprep.subr.bf16.mxu0 0
      %1958 = vmatpush1.bf16.msra.mxu0 0
      %1959 = vmatprep.subr.bf16.mxu0 0
      %1960 = vmatpush1.bf16.msra.mxu0 0
      %1961 = vmatprep.subr.bf16.mxu0 0
      %1962 = vmatpush1.bf16.msra.mxu0 0
      %1963 = vmatprep.subr.bf16.mxu0 0
      %1964 = vmatpush1.bf16.msra.mxu0 0
      %1965 = vmatprep.subr.bf16.mxu0 0
      %1966 = vmatpush1.bf16.msra.mxu0 0
      %1967 = vmatprep.subr.bf16.mxu0 0
      %1968 = vmatpush1.bf16.msra.mxu0 0
      %1969 = vmatprep.subr.bf16.mxu0 0
      %1970 = vmatpush1.bf16.msra.mxu0 0
      %1971 = vmatprep.subr.bf16.mxu0 0
      %1972 = vmatpush1.bf16.msra.mxu0 0
      %1973 = vmatprep.subr.bf16.mxu0 0
      %1974 = vmatpush1.bf16.msra.mxu0 0
      %1975 = vmatprep.subr.bf16.mxu0 0
      %1976 = vmatpush1.bf16.msra.mxu0 0
      %1977 = vmatprep.subr.bf16.mxu0 0
      %1978 = vmatpush1.bf16.msra.mxu0 0
      %1979 = vmatprep.subr.bf16.mxu0 0
      %1980 = vmatpush1.bf16.msra.mxu0 0
      %1981 = vmatprep.mubr.bf16.mxu0 0
      %1982 = vmatmul.mubr.bf16.gmra.mrb[0].mxu0 %v1898
      %v1983 = vpop.f32.mrb[0].mxu0
      %v1984 = vadd.f32 %v1894, %v1983
      %v1985 = vpop.f32.mrb[0].mxu0
      %v1986 = vpop.f32.mrb[0].mxu0
      %v1987 = vadd.f32 %v1894, %v1986
      %v1988 = vpop.f32.mrb[0].mxu0
      %1989 = vmatprep.mubr.bf16.mxu0 0
      %1990 = vmatmul.mubr.bf16.gmra.mrb[0].mxu0 %v1901
      %v1991 = vpop.f32.mrb[0].mxu0
      %v1992 = vadd.f32 %v1894, %v1991
      %v1993 = vpop.f32.mrb[0].mxu0
      %v1994 = vpop.f32.mrb[0].mxu0
      %v1995 = vadd.f32 %v1894, %v1994
      %v1996 = vpop.f32.mrb[0].mxu0
      %1997 = vmatprep.mubr.bf16.mxu0 0
      %1998 = vmatmul.mubr.bf16.gmra.mrb[0].mxu0 %v1904
      %v1999 = vpop.f32.mrb[0].mxu0
      %v2000 = vadd.f32 %v1894, %v1999
      %v2001 = vpop.f32.mrb[0].mxu0
      %v2002 = vpop.f32.mrb[0].mxu0
      %v2003 = vadd.f32 %v1894, %v2002
      %v2004 = vpop.f32.mrb[0].mxu0
      %2005 = vmatprep.mubr.bf16.mxu0 0
      %2006 = vmatmul.mubr.bf16.gmra.mrb[0].mxu0 %v1907
      %v2007 = vpop.f32.mrb[0].mxu0
      %v2008 = vadd.f32 %v1894, %v2007
      %v2009 = vpop.f32.mrb[0].mxu0
      %v2010 = vpop.f32.mrb[0].mxu0
      %v2011 = vadd.f32 %v1894, %v2010
      %v2012 = vpop.f32.mrb[0].mxu0
      %2013 = vmatprep.mubr.bf16.mxu0 0
      %2014 = vmatmul.mubr.bf16.gmra.mrb[0].mxu0 %v1910
      %v2015 = vpop.f32.mrb[0].mxu0
      %v2016 = vadd.f32 %v1894, %v2015
      %v2017 = vpop.f32.mrb[0].mxu0
      %v2018 = vpop.f32.mrb[0].mxu0
      %v2019 = vadd.f32 %v1894, %v2018
      %v2020 = vpop.f32.mrb[0].mxu0
      %2021 = vmatprep.mubr.bf16.mxu0 0
      %2022 = vmatmul.mubr.bf16.gmra.mrb[0].mxu0 %v1913
      %v2023 = vpop.f32.mrb[0].mxu0
      %v2024 = vadd.f32 %v1894, %v2023
      %v2025 = vpop.f32.mrb[0].mxu0
      %v2026 = vpop.f32.mrb[0].mxu0
      %v2027 = vadd.f32 %v1894, %v2026
      %v2028 = vpop.f32.mrb[0].mxu0
      %2029 = vmatprep.mubr.bf16.mxu0 0
      %2030 = vmatmul.mubr.bf16.gmra.mrb[0].mxu0 %v1916
      %v2031 = vpop.f32.mrb[0].mxu0
      %v2032 = vadd.f32 %v1894, %v2031
      %v2033 = vpop.f32.mrb[0].mxu0
      %v2034 = vpop.f32.mrb[0].mxu0
      %v2035 = vadd.f32 %v1894, %v2034
      %v2036 = vpop.f32.mrb[0].mxu0
      %2037 = vmatprep.mubr.bf16.mxu0 0
      %2038 = vmatmul.mubr.bf16.gmra.mrb[0].mxu0 %v1919
      %v2039 = vpop.f32.mrb[0].mxu0
      %v2040 = vadd.f32 %v1894, %v2039
      %v2041 = vpop.f32.mrb[0].mxu0
      %v2042 = vpop.f32.mrb[0].mxu0
      %v2043 = vadd.f32 %v1894, %v2042
      %v2044 = vpop.f32.mrb[0].mxu0
      %2045 = vmatprep.mubr.bf16.mxu0 0
      %2046 = vmatmul.mubr.bf16.gmra.mrb[0].mxu0 %v1922
      %v2047 = vpop.f32.mrb[0].mxu0
      %v2048 = vadd.f32 %v1894, %v2047
      %v2049 = vpop.f32.mrb[0].mxu0
      %v2050 = vpop.f32.mrb[0].mxu0
      %v2051 = vadd.f32 %v1894, %v2050
      %v2052 = vpop.f32.mrb[0].mxu0
      %2053 = vmatprep.mubr.bf16.mxu0 0
      %2054 = vmatmul.mubr.bf16.gmra.mrb[0].mxu0 %v1925
      %v2055 = vpop.f32.mrb[0].mxu0
      %v2056 = vadd.f32 %v1894, %v2055
      %v2057 = vpop.f32.mrb[0].mxu0
      %v2058 = vpop.f32.mrb[0].mxu0
      %v2059 = vadd.f32 %v1894, %v2058
      %v2060 = vpop.f32.mrb[0].mxu0
      %2061 = vmatprep.mubr.bf16.mxu0 0
      %2062 = vmatmul.mubr.bf16.gmra.mrb[0].mxu0 %v1928
      %v2063 = vpop.f32.mrb[0].mxu0
      %v2064 = vadd.f32 %v1894, %v2063
      %v2065 = vpop.f32.mrb[0].mxu0
      %v2066 = vpop.f32.mrb[0].mxu0
      %v2067 = vadd.f32 %v1894, %v2066
      %v2068 = vpop.f32.mrb[0].mxu0
      %2069 = vmatprep.mubr.bf16.mxu0 0
      %2070 = vmatmul.mubr.bf16.gmra.mrb[0].mxu0 %v1931
      %v2071 = vpop.f32.mrb[0].mxu0
      %v2072 = vadd.f32 %v1894, %v2071
      %v2073 = vpop.f32.mrb[0].mxu0
      %v2074 = vpop.f32.mrb[0].mxu0
      %v2075 = vadd.f32 %v1894, %v2074
      %v2076 = vpop.f32.mrb[0].mxu0
      %2077 = vmatprep.mubr.bf16.mxu0 0
      %2078 = vmatmul.mubr.bf16.gmra.mrb[0].mxu0 %v1934
      %v2079 = vpop.f32.mrb[0].mxu0
      %v2080 = vadd.f32 %v1894, %v2079
      %v2081 = vpop.f32.mrb[0].mxu0
      %v2082 = vpop.f32.mrb[0].mxu0
      %v2083 = vadd.f32 %v1894, %v2082
      %v2084 = vpop.f32.mrb[0].mxu0
      %2085 = vmatprep.mubr.bf16.mxu0 0
      %2086 = vmatmul.mubr.bf16.gmra.mrb[0].mxu0 %v1937
      %v2087 = vpop.f32.mrb[0].mxu0
      %v2088 = vadd.f32 %v1894, %v2087
      %v2089 = vpop.f32.mrb[0].mxu0
      %v2090 = vpop.f32.mrb[0].mxu0
      %v2091 = vadd.f32 %v1894, %v2090
      %v2092 = vpop.f32.mrb[0].mxu0
      %2093 = vmatprep.mubr.bf16.mxu0 0
      %2094 = vmatmul.mubr.bf16.gmra.mrb[0].mxu0 %v1940
      %v2095 = vpop.f32.mrb[0].mxu0
      %v2096 = vadd.f32 %v1894, %v2095
      %v2097 = vpop.f32.mrb[0].mxu0
      %v2098 = vpop.f32.mrb[0].mxu0
      %v2099 = vadd.f32 %v1894, %v2098
      %v2100 = vpop.f32.mrb[0].mxu0
      %2101 = vmatprep.mubr.bf16.mxu0 0
      %2102 = vmatmul.mubr.bf16.gmra.mrb[0].mxu0 %v1943
      %v2103 = vpop.f32.mrb[0].mxu0
      %v2104 = vadd.f32 %v1894, %v2103
      %v2105 = vpop.f32.mrb[0].mxu0
      %v2106 = vpop.f32.mrb[0].mxu0
      %v2107 = vadd.f32 %v1894, %v2106
      %v2108 = vpop.f32.mrb[0].mxu0
      %2109 = vdwg.mxu0
      %v2110 = vmax.f32 %v1984, 0.0
      %v2111 = vmax.f32 %v1987, 0.0
      %v2112 = vmax.f32 %v1992, 0.0
      %v2113 = vmax.f32 %v1995, 0.0
      %v2114 = vmax.f32 %v2000, 0.0
      %v2115 = vmax.f32 %v2003, 0.0
      %v2116 = vmax.f32 %v2008, 0.0
      %v2117 = vmax.f32 %v2011, 0.0
      %v2118 = vmax.f32 %v2016, 0.0
      %v2119 = vmax.f32 %v2019, 0.0
      %v2120 = vmax.f32 %v2024, 0.0
      %v2121 = vmax.f32 %v2027, 0.0
      %v2122 = vmax.f32 %v2032, 0.0
      %v2123 = vmax.f32 %v2035, 0.0
      %v2124 = vmax.f32 %v2040, 0.0
      %v2125 = vmax.f32 %v2043, 0.0
      %v2126 = vmax.f32 %v2048, 0.0
      %v2127 = vmax.f32 %v2051, 0.0
      %v2128 = vmax.f32 %v2056, 0.0
      %v2129 = vmax.f32 %v2059, 0.0
      %v2130 = vmax.f32 %v2064, 0.0
      %v2131 = vmax.f32 %v2067, 0.0
      %v2132 = vmax.f32 %v2072, 0.0
      %v2133 = vmax.f32 %v2075, 0.0
      %v2134 = vmax.f32 %v2080, 0.0
      %v2135 = vmax.f32 %v2083, 0.0
      %v2136 = vmax.f32 %v2088, 0.0
      %v2137 = vmax.f32 %v2091, 0.0
      %v2138 = vmax.f32 %v2096, 0.0
      %v2139 = vmax.f32 %v2099, 0.0
      %v2140 = vmax.f32 %v2104, 0.0
      %v2141 = vmax.f32 %v2107, 0.0
      %v2142 = vpack.c.bf16 %v2111, %v2110
      %v2143 = vpack.c.bf16 %v2113, %v2112
      %v2144 = vpack.c.bf16 %v2115, %v2114
      %v2145 = vpack.c.bf16 %v2117, %v2116
      %v2146 = vpack.c.bf16 %v2119, %v2118
      %v2147 = vpack.c.bf16 %v2121, %v2120
      %v2148 = vpack.c.bf16 %v2123, %v2122
      %v2149 = vpack.c.bf16 %v2125, %v2124
      %v2150 = vpack.c.bf16 %v2127, %v2126
      %v2151 = vpack.c.bf16 %v2129, %v2128
      %v2152 = vpack.c.bf16 %v2131, %v2130
      %v2153 = vpack.c.bf16 %v2133, %v2132
      %v2154 = vpack.c.bf16 %v2135, %v2134
      %v2155 = vpack.c.bf16 %v2137, %v2136
      %v2156 = vpack.c.bf16 %v2139, %v2138
      %v2157 = vpack.c.bf16 %v2141, %v2140
      %v2158 = vld [vmem:[%s10] sm:$0xf]
      %v2159 = vld [vmem:[%s10 + $0x4] sm:$0xf]
      %v2160 = vld [vmem:[%s10 + $0x8] sm:$0xf]
      %v2161 = vld [vmem:[%s10 + $0xc] sm:$0xf]
      %v2162 = vld [vmem:[%s11] sm:$0x1]
      %v2164 = vlaneseq
      %v2165 = vshrl.u32 %v2164, 7
      %v2166 = vsub.s32 0, %v2165
      %v2167 = vrot.slane %v2162, %v2166
      %v2173 = vunpack.c.l.b16 %v2158
      %v2174 = vunpack.c.l.b16 %v2159
      %v2175 = vunpack.c.l.b16 %v2160
      %v2176 = vunpack.c.l.b16 %v2161
      %v2177 = vpack.c.b16 %v2174, %v2173
      %v2178 = vpack.c.b16 %v2176, %v2175
      %v2182 = vsel %vm902, %v2142, 0
      %v2185 = vsel %vm902, %v2143, 0
      %v2188 = vsel %vm902, %v2144, 0
      %v2191 = vsel %vm902, %v2145, 0
      %v2194 = vsel %vm902, %v2146, 0
      %v2197 = vsel %vm902, %v2147, 0
      %v2200 = vsel %vm902, %v2148, 0
      %v2203 = vsel %vm902, %v2149, 0
      %v2206 = vsel %vm902, %v2150, 0
      %v2209 = vsel %vm902, %v2151, 0
      %v2212 = vsel %vm902, %v2152, 0
      %v2215 = vsel %vm902, %v2153, 0
      %v2218 = vsel %vm902, %v2154, 0
      %v2221 = vsel %vm902, %v2155, 0
      %v2224 = vsel %vm902, %v2156, 0
      %v2227 = vsel %vm902, %v2157, 0
      %2229 = vmatprep.subr.bf16.mxu0 0
      %2230 = vmatpush1.bf16.msra.mxu0 %v2177
      %2231 = vmatprep.subr.bf16.mxu0 0
      %2232 = vmatpush1.bf16.msra.mxu0 %v2178
      %2233 = vmatprep.subr.bf16.mxu0 0
      %2234 = vmatpush1.bf16.msra.mxu0 0
      %2235 = vmatprep.subr.bf16.mxu0 0
      %2236 = vmatpush1.bf16.msra.mxu0 0
      %2237 = vmatprep.subr.bf16.mxu0 0
      %2238 = vmatpush1.bf16.msra.mxu0 0
      %2239 = vmatprep.subr.bf16.mxu0 0
      %2240 = vmatpush1.bf16.msra.mxu0 0
      %2241 = vmatprep.subr.bf16.mxu0 0
      %2242 = vmatpush1.bf16.msra.mxu0 0
      %2243 = vmatprep.subr.bf16.mxu0 0
      %2244 = vmatpush1.bf16.msra.mxu0 0
      %2245 = vmatprep.subr.bf16.mxu0 0
      %2246 = vmatpush1.bf16.msra.mxu0 0
      %2247 = vmatprep.subr.bf16.mxu0 0
      %2248 = vmatpush1.bf16.msra.mxu0 0
      %2249 = vmatprep.subr.bf16.mxu0 0
      %2250 = vmatpush1.bf16.msra.mxu0 0
      %2251 = vmatprep.subr.bf16.mxu0 0
      %2252 = vmatpush1.bf16.msra.mxu0 0
      %2253 = vmatprep.subr.bf16.mxu0 0
      %2254 = vmatpush1.bf16.msra.mxu0 0
      %2255 = vmatprep.subr.bf16.mxu0 0
      %2256 = vmatpush1.bf16.msra.mxu0 0
      %2257 = vmatprep.subr.bf16.mxu0 0
      %2258 = vmatpush1.bf16.msra.mxu0 0
      %2259 = vmatprep.subr.bf16.mxu0 0
      %2260 = vmatpush1.bf16.msra.mxu0 0
      %2261 = vmatprep.mubr.bf16.mxu0 0
      %2262 = vmatmul.mubr.bf16.gmra.mrb[0].mxu0 %v2182
      %v2263 = vpop.f32.mrb[0].mxu0
      %v2264 = vadd.f32 %v2167, %v2263
      %v2265 = vpop.f32.mrb[0].mxu0
      %v2266 = vpop.f32.mrb[0].mxu0
      %v2267 = vadd.f32 %v2167, %v2266
      %v2268 = vpop.f32.mrb[0].mxu0
      %2269 = vmatprep.mubr.bf16.mxu0 0
      %2270 = vmatmul.mubr.bf16.gmra.mrb[0].mxu0 %v2185
      %v2271 = vpop.f32.mrb[0].mxu0
      %v2272 = vadd.f32 %v2167, %v2271
      %v2273 = vpop.f32.mrb[0].mxu0
      %v2274 = vpop.f32.mrb[0].mxu0
      %v2275 = vadd.f32 %v2167, %v2274
      %v2276 = vpop.f32.mrb[0].mxu0
      %2277 = vmatprep.mubr.bf16.mxu0 0
      %2278 = vmatmul.mubr.bf16.gmra.mrb[0].mxu0 %v2188
      %v2279 = vpop.f32.mrb[0].mxu0
      %v2280 = vadd.f32 %v2167, %v2279
      %v2281 = vpop.f32.mrb[0].mxu0
      %v2282 = vpop.f32.mrb[0].mxu0
      %v2283 = vadd.f32 %v2167, %v2282
      %v2284 = vpop.f32.mrb[0].mxu0
      %2285 = vmatprep.mubr.bf16.mxu0 0
      %2286 = vmatmul.mubr.bf16.gmra.mrb[0].mxu0 %v2191
      %v2287 = vpop.f32.mrb[0].mxu0
      %v2288 = vadd.f32 %v2167, %v2287
      %v2289 = vpop.f32.mrb[0].mxu0
      %v2290 = vpop.f32.mrb[0].mxu0
      %v2291 = vadd.f32 %v2167, %v2290
      %v2292 = vpop.f32.mrb[0].mxu0
      %2293 = vmatprep.mubr.bf16.mxu0 0
      %2294 = vmatmul.mubr.bf16.gmra.mrb[0].mxu0 %v2194
      %v2295 = vpop.f32.mrb[0].mxu0
      %v2296 = vadd.f32 %v2167, %v2295
      %v2297 = vpop.f32.mrb[0].mxu0
      %v2298 = vpop.f32.mrb[0].mxu0
      %v2299 = vadd.f32 %v2167, %v2298
      %v2300 = vpop.f32.mrb[0].mxu0
      %2301 = vmatprep.mubr.bf16.mxu0 0
      %2302 = vmatmul.mubr.bf16.gmra.mrb[0].mxu0 %v2197
      %v2303 = vpop.f32.mrb[0].mxu0
      %v2304 = vadd.f32 %v2167, %v2303
      %v2305 = vpop.f32.mrb[0].mxu0
      %v2306 = vpop.f32.mrb[0].mxu0
      %v2307 = vadd.f32 %v2167, %v2306
      %v2308 = vpop.f32.mrb[0].mxu0
      %2309 = vmatprep.mubr.bf16.mxu0 0
      %2310 = vmatmul.mubr.bf16.gmra.mrb[0].mxu0 %v2200
      %v2311 = vpop.f32.mrb[0].mxu0
      %v2312 = vadd.f32 %v2167, %v2311
      %v2313 = vpop.f32.mrb[0].mxu0
      %v2314 = vpop.f32.mrb[0].mxu0
      %v2315 = vadd.f32 %v2167, %v2314
      %v2316 = vpop.f32.mrb[0].mxu0
      %2317 = vmatprep.mubr.bf16.mxu0 0
      %2318 = vmatmul.mubr.bf16.gmra.mrb[0].mxu0 %v2203
      %v2319 = vpop.f32.mrb[0].mxu0
      %v2320 = vadd.f32 %v2167, %v2319
      %v2321 = vpop.f32.mrb[0].mxu0
      %v2322 = vpop.f32.mrb[0].mxu0
      %v2323 = vadd.f32 %v2167, %v2322
      %v2324 = vpop.f32.mrb[0].mxu0
      %2325 = vmatprep.mubr.bf16.mxu0 0
      %2326 = vmatmul.mubr.bf16.gmra.mrb[0].mxu0 %v2206
      %v2327 = vpop.f32.mrb[0].mxu0
      %v2328 = vadd.f32 %v2167, %v2327
      %v2329 = vpop.f32.mrb[0].mxu0
      %v2330 = vpop.f32.mrb[0].mxu0
      %v2331 = vadd.f32 %v2167, %v2330
      %v2332 = vpop.f32.mrb[0].mxu0
      %2333 = vmatprep.mubr.bf16.mxu0 0
      %2334 = vmatmul.mubr.bf16.gmra.mrb[0].mxu0 %v2209
      %v2335 = vpop.f32.mrb[0].mxu0
      %v2336 = vadd.f32 %v2167, %v2335
      %v2337 = vpop.f32.mrb[0].mxu0
      %v2338 = vpop.f32.mrb[0].mxu0
      %v2339 = vadd.f32 %v2167, %v2338
      %v2340 = vpop.f32.mrb[0].mxu0
      %2341 = vmatprep.mubr.bf16.mxu0 0
      %2342 = vmatmul.mubr.bf16.gmra.mrb[0].mxu0 %v2212
      %v2343 = vpop.f32.mrb[0].mxu0
      %v2344 = vadd.f32 %v2167, %v2343
      %v2345 = vpop.f32.mrb[0].mxu0
      %v2346 = vpop.f32.mrb[0].mxu0
      %v2347 = vadd.f32 %v2167, %v2346
      %v2348 = vpop.f32.mrb[0].mxu0
      %2349 = vmatprep.mubr.bf16.mxu0 0
      %2350 = vmatmul.mubr.bf16.gmra.mrb[0].mxu0 %v2215
      %v2351 = vpop.f32.mrb[0].mxu0
      %v2352 = vadd.f32 %v2167, %v2351
      %v2353 = vpop.f32.mrb[0].mxu0
      %v2354 = vpop.f32.mrb[0].mxu0
      %v2355 = vadd.f32 %v2167, %v2354
      %v2356 = vpop.f32.mrb[0].mxu0
      %2357 = vmatprep.mubr.bf16.mxu0 0
      %2358 = vmatmul.mubr.bf16.gmra.mrb[0].mxu0 %v2218
      %v2359 = vpop.f32.mrb[0].mxu0
      %v2360 = vadd.f32 %v2167, %v2359
      %v2361 = vpop.f32.mrb[0].mxu0
      %v2362 = vpop.f32.mrb[0].mxu0
      %v2363 = vadd.f32 %v2167, %v2362
      %v2364 = vpop.f32.mrb[0].mxu0
      %2365 = vmatprep.mubr.bf16.mxu0 0
      %2366 = vmatmul.mubr.bf16.gmra.mrb[0].mxu0 %v2221
      %v2367 = vpop.f32.mrb[0].mxu0
      %v2368 = vadd.f32 %v2167, %v2367
      %v2369 = vpop.f32.mrb[0].mxu0
      %v2370 = vpop.f32.mrb[0].mxu0
      %v2371 = vadd.f32 %v2167, %v2370
      %v2372 = vpop.f32.mrb[0].mxu0
      %2373 = vmatprep.mubr.bf16.mxu0 0
      %2374 = vmatmul.mubr.bf16.gmra.mrb[0].mxu0 %v2224
      %v2375 = vpop.f32.mrb[0].mxu0
      %v2376 = vadd.f32 %v2167, %v2375
      %v2377 = vpop.f32.mrb[0].mxu0
      %v2378 = vpop.f32.mrb[0].mxu0
      %v2379 = vadd.f32 %v2167, %v2378
      %v2380 = vpop.f32.mrb[0].mxu0
      %2381 = vmatprep.mubr.bf16.mxu0 0
      %2382 = vmatmul.mubr.bf16.gmra.mrb[0].mxu0 %v2227
      %v2383 = vpop.f32.mrb[0].mxu0
      %v2384 = vadd.f32 %v2167, %v2383
      %v2385 = vpop.f32.mrb[0].mxu0
      %v2386 = vpop.f32.mrb[0].mxu0
      %v2387 = vadd.f32 %v2167, %v2386
      %v2388 = vpop.f32.mrb[0].mxu0
      %2389 = vdwg.mxu0
      %v2390 = vmax.f32 %v2264, 0.0
      %v2391 = vmax.f32 %v2267, 0.0
      %v2392 = vmax.f32 %v2272, 0.0
      %v2393 = vmax.f32 %v2275, 0.0
      %v2394 = vmax.f32 %v2280, 0.0
      %v2395 = vmax.f32 %v2283, 0.0
      %v2396 = vmax.f32 %v2288, 0.0
      %v2397 = vmax.f32 %v2291, 0.0
      %v2398 = vmax.f32 %v2296, 0.0
      %v2399 = vmax.f32 %v2299, 0.0
      %v2400 = vmax.f32 %v2304, 0.0
      %v2401 = vmax.f32 %v2307, 0.0
      %v2402 = vmax.f32 %v2312, 0.0
      %v2403 = vmax.f32 %v2315, 0.0
      %v2404 = vmax.f32 %v2320, 0.0
      %v2405 = vmax.f32 %v2323, 0.0
      %v2406 = vmax.f32 %v2328, 0.0
      %v2407 = vmax.f32 %v2331, 0.0
      %v2408 = vmax.f32 %v2336, 0.0
      %v2409 = vmax.f32 %v2339, 0.0
      %v2410 = vmax.f32 %v2344, 0.0
      %v2411 = vmax.f32 %v2347, 0.0
      %v2412 = vmax.f32 %v2352, 0.0
      %v2413 = vmax.f32 %v2355, 0.0
      %v2414 = vmax.f32 %v2360, 0.0
      %v2415 = vmax.f32 %v2363, 0.0
      %v2416 = vmax.f32 %v2368, 0.0
      %v2417 = vmax.f32 %v2371, 0.0
      %v2418 = vmax.f32 %v2376, 0.0
      %v2419 = vmax.f32 %v2379, 0.0
      %v2420 = vmax.f32 %v2384, 0.0
      %v2421 = vmax.f32 %v2387, 0.0
      %v2422 = vpack.c.bf16 %v2391, %v2390
      %v2423 = vpack.c.bf16 %v2393, %v2392
      %v2424 = vpack.c.bf16 %v2395, %v2394
      %v2425 = vpack.c.bf16 %v2397, %v2396
      %v2426 = vpack.c.bf16 %v2399, %v2398
      %v2427 = vpack.c.bf16 %v2401, %v2400
      %v2428 = vpack.c.bf16 %v2403, %v2402
      %v2429 = vpack.c.bf16 %v2405, %v2404
      %v2430 = vpack.c.bf16 %v2407, %v2406
      %v2431 = vpack.c.bf16 %v2409, %v2408
      %v2432 = vpack.c.bf16 %v2411, %v2410
      %v2433 = vpack.c.bf16 %v2413, %v2412
      %v2434 = vpack.c.bf16 %v2415, %v2414
      %v2435 = vpack.c.bf16 %v2417, %v2416
      %v2436 = vpack.c.bf16 %v2419, %v2418
      %v2437 = vpack.c.bf16 %v2421, %v2420
      %v2438 = vld [vmem:[%s12] sm:$0xf]
      %v2439 = vld [vmem:[%s12 + $0x4] sm:$0xf]
      %v2440 = vld [vmem:[%s12 + $0x8] sm:$0xf]
      %v2441 = vld [vmem:[%s12 + $0xc] sm:$0xf]
      %v2442 = vld [vmem:[%s13] sm:$0x1]
      %v2444 = vlaneseq
      %v2445 = vshrl.u32 %v2444, 7
      %v2446 = vsub.s32 0, %v2445
      %v2447 = vrot.slane %v2442, %v2446
      %v2453 = vunpack.c.l.b16 %v2438
      %v2454 = vunpack.c.l.b16 %v2439
      %v2455 = vunpack.c.l.b16 %v2440
      %v2456 = vunpack.c.l.b16 %v2441
      %v2457 = vpack.c.b16 %v2454, %v2453
      %v2458 = vpack.c.b16 %v2456, %v2455
      %v2462 = vsel %vm902, %v2422, 0
      %v2465 = vsel %vm902, %v2423, 0
      %v2468 = vsel %vm902, %v2424, 0
      %v2471 = vsel %vm902, %v2425, 0
      %v2474 = vsel %vm902, %v2426, 0
      %v2477 = vsel %vm902, %v2427, 0
      %v2480 = vsel %vm902, %v2428, 0
      %v2483 = vsel %vm902, %v2429, 0
      %v2486 = vsel %vm902, %v2430, 0
      %v2489 = vsel %vm902, %v2431, 0
      %v2492 = vsel %vm902, %v2432, 0
      %v2495 = vsel %vm902, %v2433, 0
      %v2498 = vsel %vm902, %v2434, 0
      %v2501 = vsel %vm902, %v2435, 0
      %v2504 = vsel %vm902, %v2436, 0
      %v2507 = vsel %vm902, %v2437, 0
      %2509 = vmatprep.subr.bf16.mxu0 0
      %2510 = vmatpush1.bf16.msra.mxu0 %v2457
      %2511 = vmatprep.subr.bf16.mxu0 0
      %2512 = vmatpush1.bf16.msra.mxu0 %v2458
      %2513 = vmatprep.subr.bf16.mxu0 0
      %2514 = vmatpush1.bf16.msra.mxu0 0
      %2515 = vmatprep.subr.bf16.mxu0 0
      %2516 = vmatpush1.bf16.msra.mxu0 0
      %2517 = vmatprep.subr.bf16.mxu0 0
      %2518 = vmatpush1.bf16.msra.mxu0 0
      %2519 = vmatprep.subr.bf16.mxu0 0
      %2520 = vmatpush1.bf16.msra.mxu0 0
      %2521 = vmatprep.subr.bf16.mxu0 0
      %2522 = vmatpush1.bf16.msra.mxu0 0
      %2523 = vmatprep.subr.bf16.mxu0 0
      %2524 = vmatpush1.bf16.msra.mxu0 0
      %2525 = vmatprep.subr.bf16.mxu0 0
      %2526 = vmatpush1.bf16.msra.mxu0 0
      %2527 = vmatprep.subr.bf16.mxu0 0
      %2528 = vmatpush1.bf16.msra.mxu0 0
      %2529 = vmatprep.subr.bf16.mxu0 0
      %2530 = vmatpush1.bf16.msra.mxu0 0
      %2531 = vmatprep.subr.bf16.mxu0 0
      %2532 = vmatpush1.bf16.msra.mxu0 0
      %2533 = vmatprep.subr.bf16.mxu0 0
      %2534 = vmatpush1.bf16.msra.mxu0 0
      %2535 = vmatprep.subr.bf16.mxu0 0
      %2536 = vmatpush1.bf16.msra.mxu0 0
      %2537 = vmatprep.subr.bf16.mxu0 0
      %2538 = vmatpush1.bf16.msra.mxu0 0
      %2539 = vmatprep.subr.bf16.mxu0 0
      %2540 = vmatpush1.bf16.msra.mxu0 0
      %2541 = vmatprep.mubr.bf16.mxu0 0
      %2542 = vmatmul.mubr.bf16.gmra.mrb[0].mxu0 %v2462
      %v2543 = vpop.f32.mrb[0].mxu0
      %v2544 = vadd.f32 %v2447, %v2543
      %v2545 = vpop.f32.mrb[0].mxu0
      %v2546 = vpop.f32.mrb[0].mxu0
      %v2547 = vadd.f32 %v2447, %v2546
      %v2548 = vpop.f32.mrb[0].mxu0
      %2549 = vmatprep.mubr.bf16.mxu0 0
      %2550 = vmatmul.mubr.bf16.gmra.mrb[0].mxu0 %v2465
      %v2551 = vpop.f32.mrb[0].mxu0
      %v2552 = vadd.f32 %v2447, %v2551
      %v2553 = vpop.f32.mrb[0].mxu0
      %v2554 = vpop.f32.mrb[0].mxu0
      %v2555 = vadd.f32 %v2447, %v2554
      %v2556 = vpop.f32.mrb[0].mxu0
      %2557 = vmatprep.mubr.bf16.mxu0 0
      %2558 = vmatmul.mubr.bf16.gmra.mrb[0].mxu0 %v2468
      %v2559 = vpop.f32.mrb[0].mxu0
      %v2560 = vadd.f32 %v2447, %v2559
      %v2561 = vpop.f32.mrb[0].mxu0
      %v2562 = vpop.f32.mrb[0].mxu0
      %v2563 = vadd.f32 %v2447, %v2562
      %v2564 = vpop.f32.mrb[0].mxu0
      %2565 = vmatprep.mubr.bf16.mxu0 0
      %2566 = vmatmul.mubr.bf16.gmra.mrb[0].mxu0 %v2471
      %v2567 = vpop.f32.mrb[0].mxu0
      %v2568 = vadd.f32 %v2447, %v2567
      %v2569 = vpop.f32.mrb[0].mxu0
      %v2570 = vpop.f32.mrb[0].mxu0
      %v2571 = vadd.f32 %v2447, %v2570
      %v2572 = vpop.f32.mrb[0].mxu0
      %2573 = vmatprep.mubr.bf16.mxu0 0
      %2574 = vmatmul.mubr.bf16.gmra.mrb[0].mxu0 %v2474
      %v2575 = vpop.f32.mrb[0].mxu0
      %v2576 = vadd.f32 %v2447, %v2575
      %v2577 = vpop.f32.mrb[0].mxu0
      %v2578 = vpop.f32.mrb[0].mxu0
      %v2579 = vadd.f32 %v2447, %v2578
      %v2580 = vpop.f32.mrb[0].mxu0
      %2581 = vmatprep.mubr.bf16.mxu0 0
      %2582 = vmatmul.mubr.bf16.gmra.mrb[0].mxu0 %v2477
      %v2583 = vpop.f32.mrb[0].mxu0
      %v2584 = vadd.f32 %v2447, %v2583
      %v2585 = vpop.f32.mrb[0].mxu0
      %v2586 = vpop.f32.mrb[0].mxu0
      %v2587 = vadd.f32 %v2447, %v2586
      %v2588 = vpop.f32.mrb[0].mxu0
      %2589 = vmatprep.mubr.bf16.mxu0 0
      %2590 = vmatmul.mubr.bf16.gmra.mrb[0].mxu0 %v2480
      %v2591 = vpop.f32.mrb[0].mxu0
      %v2592 = vadd.f32 %v2447, %v2591
      %v2593 = vpop.f32.mrb[0].mxu0
      %v2594 = vpop.f32.mrb[0].mxu0
      %v2595 = vadd.f32 %v2447, %v2594
      %v2596 = vpop.f32.mrb[0].mxu0
      %2597 = vmatprep.mubr.bf16.mxu0 0
      %2598 = vmatmul.mubr.bf16.gmra.mrb[0].mxu0 %v2483
      %v2599 = vpop.f32.mrb[0].mxu0
      %v2600 = vadd.f32 %v2447, %v2599
      %v2601 = vpop.f32.mrb[0].mxu0
      %v2602 = vpop.f32.mrb[0].mxu0
      %v2603 = vadd.f32 %v2447, %v2602
      %v2604 = vpop.f32.mrb[0].mxu0
      %2605 = vmatprep.mubr.bf16.mxu0 0
      %2606 = vmatmul.mubr.bf16.gmra.mrb[0].mxu0 %v2486
      %v2607 = vpop.f32.mrb[0].mxu0
      %v2608 = vadd.f32 %v2447, %v2607
      %v2609 = vpop.f32.mrb[0].mxu0
      %v2610 = vpop.f32.mrb[0].mxu0
      %v2611 = vadd.f32 %v2447, %v2610
      %v2612 = vpop.f32.mrb[0].mxu0
      %2613 = vmatprep.mubr.bf16.mxu0 0
      %2614 = vmatmul.mubr.bf16.gmra.mrb[0].mxu0 %v2489
      %v2615 = vpop.f32.mrb[0].mxu0
      %v2616 = vadd.f32 %v2447, %v2615
      %v2617 = vpop.f32.mrb[0].mxu0
      %v2618 = vpop.f32.mrb[0].mxu0
      %v2619 = vadd.f32 %v2447, %v2618
      %v2620 = vpop.f32.mrb[0].mxu0
      %2621 = vmatprep.mubr.bf16.mxu0 0
      %2622 = vmatmul.mubr.bf16.gmra.mrb[0].mxu0 %v2492
      %v2623 = vpop.f32.mrb[0].mxu0
      %v2624 = vadd.f32 %v2447, %v2623
      %v2625 = vpop.f32.mrb[0].mxu0
      %v2626 = vpop.f32.mrb[0].mxu0
      %v2627 = vadd.f32 %v2447, %v2626
      %v2628 = vpop.f32.mrb[0].mxu0
      %2629 = vmatprep.mubr.bf16.mxu0 0
      %2630 = vmatmul.mubr.bf16.gmra.mrb[0].mxu0 %v2495
      %v2631 = vpop.f32.mrb[0].mxu0
      %v2632 = vadd.f32 %v2447, %v2631
      %v2633 = vpop.f32.mrb[0].mxu0
      %v2634 = vpop.f32.mrb[0].mxu0
      %v2635 = vadd.f32 %v2447, %v2634
      %v2636 = vpop.f32.mrb[0].mxu0
      %2637 = vmatprep.mubr.bf16.mxu0 0
      %2638 = vmatmul.mubr.bf16.gmra.mrb[0].mxu0 %v2498
      %v2639 = vpop.f32.mrb[0].mxu0
      %v2640 = vadd.f32 %v2447, %v2639
      %v2641 = vpop.f32.mrb[0].mxu0
      %v2642 = vpop.f32.mrb[0].mxu0
      %v2643 = vadd.f32 %v2447, %v2642
      %v2644 = vpop.f32.mrb[0].mxu0
      %2645 = vmatprep.mubr.bf16.mxu0 0
      %2646 = vmatmul.mubr.bf16.gmra.mrb[0].mxu0 %v2501
      %v2647 = vpop.f32.mrb[0].mxu0
      %v2648 = vadd.f32 %v2447, %v2647
      %v2649 = vpop.f32.mrb[0].mxu0
      %v2650 = vpop.f32.mrb[0].mxu0
      %v2651 = vadd.f32 %v2447, %v2650
      %v2652 = vpop.f32.mrb[0].mxu0
      %2653 = vmatprep.mubr.bf16.mxu0 0
      %2654 = vmatmul.mubr.bf16.gmra.mrb[0].mxu0 %v2504
      %v2655 = vpop.f32.mrb[0].mxu0
      %v2656 = vadd.f32 %v2447, %v2655
      %v2657 = vpop.f32.mrb[0].mxu0
      %v2658 = vpop.f32.mrb[0].mxu0
      %v2659 = vadd.f32 %v2447, %v2658
      %v2660 = vpop.f32.mrb[0].mxu0
      %2661 = vmatprep.mubr.bf16.mxu0 0
      %2662 = vmatmul.mubr.bf16.gmra.mrb[0].mxu0 %v2507
      %v2663 = vpop.f32.mrb[0].mxu0
      %v2664 = vadd.f32 %v2447, %v2663
      %v2665 = vpop.f32.mrb[0].mxu0
      %v2666 = vpop.f32.mrb[0].mxu0
      %v2667 = vadd.f32 %v2447, %v2666
      %v2668 = vpop.f32.mrb[0].mxu0
      %2669 = vdwg.mxu0
      %v2670 = vtanh.pop %v2544
      %v2671 = vtanh.pop %v2547
      %v2672 = vtanh.pop %v2552
      %v2673 = vtanh.pop %v2555
      %v2674 = vtanh.pop %v2560
      %v2675 = vtanh.pop %v2563
      %v2676 = vtanh.pop %v2568
      %v2677 = vtanh.pop %v2571
      %v2678 = vtanh.pop %v2576
      %v2679 = vtanh.pop %v2579
      %v2680 = vtanh.pop %v2584
      %v2681 = vtanh.pop %v2587
      %v2682 = vtanh.pop %v2592
      %v2683 = vtanh.pop %v2595
      %v2684 = vtanh.pop %v2600
      %v2685 = vtanh.pop %v2603
      %v2686 = vtanh.pop %v2608
      %v2687 = vtanh.pop %v2611
      %v2688 = vtanh.pop %v2616
      %v2689 = vtanh.pop %v2619
      %v2690 = vtanh.pop %v2624
      %v2691 = vtanh.pop %v2627
      %v2692 = vtanh.pop %v2632
      %v2693 = vtanh.pop %v2635
      %v2694 = vtanh.pop %v2640
      %v2695 = vtanh.pop %v2643
      %v2696 = vtanh.pop %v2648
      %v2697 = vtanh.pop %v2651
      %v2698 = vtanh.pop %v2656
      %v2699 = vtanh.pop %v2659
      %v2700 = vtanh.pop %v2664
      %v2701 = vtanh.pop %v2667
      %2702 = vst.msk [vmem:[%s491] sm:$0xff] %vm621, %v2670
      %2703 = vst.msk [vmem:[%s491 + $0x8] sm:$0xff] %vm621, %v2671
      %2704 = vst.msk [vmem:[%s491 + $0x10] sm:$0xff] %vm621, %v2672
      %2705 = vst.msk [vmem:[%s491 + $0x18] sm:$0xff] %vm621, %v2673
      %2706 = vst.msk [vmem:[%s491 + $0x20] sm:$0xff] %vm621, %v2674
      %2707 = vst.msk [vmem:[%s491 + $0x28] sm:$0xff] %vm621, %v2675
      %2708 = vst.msk [vmem:[%s491 + $0x30] sm:$0xff] %vm621, %v2676
      %2709 = vst.msk [vmem:[%s491 + $0x38] sm:$0xff] %vm621, %v2677
      %2710 = vst.msk [vmem:[%s491 + $0x40] sm:$0xff] %vm621, %v2678
      %2711 = vst.msk [vmem:[%s491 + $0x48] sm:$0xff] %vm621, %v2679
      %2712 = vst.msk [vmem:[%s491 + $0x50] sm:$0xff] %vm621, %v2680
      %2713 = vst.msk [vmem:[%s491 + $0x58] sm:$0xff] %vm621, %v2681
      %2714 = vst.msk [vmem:[%s491 + $0x60] sm:$0xff] %vm621, %v2682
      %2715 = vst.msk [vmem:[%s491 + $0x68] sm:$0xff] %vm621, %v2683
      %2716 = vst.msk [vmem:[%s491 + $0x70] sm:$0xff] %vm621, %v2684
      %2717 = vst.msk [vmem:[%s491 + $0x78] sm:$0xff] %vm621, %v2685
      %2718 = vst.msk [vmem:[%s491 + $0x80] sm:$0xff] %vm621, %v2686
      %2719 = vst.msk [vmem:[%s491 + $0x88] sm:$0xff] %vm621, %v2687
      %2720 = vst.msk [vmem:[%s491 + $0x90] sm:$0xff] %vm621, %v2688
      %2721 = vst.msk [vmem:[%s491 + $0x98] sm:$0xff] %vm621, %v2689
      %2722 = vst.msk [vmem:[%s491 + $0xa0] sm:$0xff] %vm621, %v2690
      %2723 = vst.msk [vmem:[%s491 + $0xa8] sm:$0xff] %vm621, %v2691
      %2724 = vst.msk [vmem:[%s491 + $0xb0] sm:$0xff] %vm621, %v2692
      %2725 = vst.msk [vmem:[%s491 + $0xb8] sm:$0xff] %vm621, %v2693
      %2726 = vst.msk [vmem:[%s491 + $0xc0] sm:$0xff] %vm621, %v2694
      %2727 = vst.msk [vmem:[%s491 + $0xc8] sm:$0xff] %vm621, %v2695
      %2728 = vst.msk [vmem:[%s491 + $0xd0] sm:$0xff] %vm621, %v2696
      %2729 = vst.msk [vmem:[%s491 + $0xd8] sm:$0xff] %vm621, %v2697
      %2730 = vst.msk [vmem:[%s491 + $0xe0] sm:$0xff] %vm621, %v2698
      %2731 = vst.msk [vmem:[%s491 + $0xe8] sm:$0xff] %vm621, %v2699
      %2732 = vst.msk [vmem:[%s491 + $0xf0] sm:$0xff] %vm621, %v2700
      %2733 = vst.msk [vmem:[%s491 + $0xf8] sm:$0xff] %vm621, %v2701
      %2766 = vrot.lane.b32.xlu0 %v1266, 16
      %v2767 = vpop.permute.xlu0 %2766
      %2768 = vrot.lane.b32.xlu0 %v1269, 16
      %v2769 = vpop.permute.xlu0 %2768
      %2770 = vrot.lane.b32.xlu0 %v1274, 16
      %v2771 = vpop.permute.xlu0 %2770
      %2772 = vrot.lane.b32.xlu0 %v1277, 16
      %v2773 = vpop.permute.xlu0 %2772
      %2774 = vrot.lane.b32.xlu0 %v1282, 16
      %v2775 = vpop.permute.xlu0 %2774
      %2776 = vrot.lane.b32.xlu0 %v1285, 16
      %v2777 = vpop.permute.xlu0 %2776
      %2778 = vrot.lane.b32.xlu0 %v1290, 16
      %v2779 = vpop.permute.xlu0 %2778
      %2780 = vrot.lane.b32.xlu0 %v1293, 16
      %v2781 = vpop.permute.xlu0 %2780
      %2782 = vrot.lane.b32.xlu0 %v1298, 16
      %v2783 = vpop.permute.xlu0 %2782
      %2784 = vrot.lane.b32.xlu0 %v1301, 16
      %v2785 = vpop.permute.xlu0 %2784
      %2786 = vrot.lane.b32.xlu0 %v1306, 16
      %v2787 = vpop.permute.xlu0 %2786
      %2788 = vrot.lane.b32.xlu0 %v1309, 16
      %v2789 = vpop.permute.xlu0 %2788
      %2790 = vrot.lane.b32.xlu0 %v1314, 16
      %v2791 = vpop.permute.xlu0 %2790
      %2792 = vrot.lane.b32.xlu0 %v1317, 16
      %v2793 = vpop.permute.xlu0 %2792
      %2794 = vrot.lane.b32.xlu0 %v1322, 16
      %v2795 = vpop.permute.xlu0 %2794
      %2796 = vrot.lane.b32.xlu0 %v1325, 16
      %v2797 = vpop.permute.xlu0 %2796
      %2798 = vrot.lane.b32.xlu0 %v1330, 16
      %v2799 = vpop.permute.xlu0 %2798
      %2800 = vrot.lane.b32.xlu0 %v1333, 16
      %v2801 = vpop.permute.xlu0 %2800
      %2802 = vrot.lane.b32.xlu0 %v1338, 16
      %v2803 = vpop.permute.xlu0 %2802
      %2804 = vrot.lane.b32.xlu0 %v1341, 16
      %v2805 = vpop.permute.xlu0 %2804
      %2806 = vrot.lane.b32.xlu0 %v1346, 16
      %v2807 = vpop.permute.xlu0 %2806
      %2808 = vrot.lane.b32.xlu0 %v1349, 16
      %v2809 = vpop.permute.xlu0 %2808
      %2810 = vrot.lane.b32.xlu0 %v1354, 16
      %v2811 = vpop.permute.xlu0 %2810
      %2812 = vrot.lane.b32.xlu0 %v1357, 16
      %v2813 = vpop.permute.xlu0 %2812
      %2814 = vrot.lane.b32.xlu0 %v1362, 16
      %v2815 = vpop.permute.xlu0 %2814
      %2816 = vrot.lane.b32.xlu0 %v1365, 16
      %v2817 = vpop.permute.xlu0 %2816
      %2818 = vrot.lane.b32.xlu0 %v1370, 16
      %v2819 = vpop.permute.xlu0 %2818
      %2820 = vrot.lane.b32.xlu0 %v1373, 16
      %v2821 = vpop.permute.xlu0 %2820
      %2822 = vrot.lane.b32.xlu0 %v1378, 16
      %v2823 = vpop.permute.xlu0 %2822
      %2824 = vrot.lane.b32.xlu0 %v1381, 16
      %v2825 = vpop.permute.xlu0 %2824
      %2826 = vrot.lane.b32.xlu0 %v1386, 16
      %v2827 = vpop.permute.xlu0 %2826
      %2828 = vrot.lane.b32.xlu0 %v1389, 16
      %v2829 = vpop.permute.xlu0 %2828
      %vm2862 = vcmask 195712
      %2863 = vst.msk [vmem:[%s491] sm:$0xff] %vm2862, %v2767
      %2864 = vst.msk [vmem:[%s491 + $0x8] sm:$0xff] %vm2862, %v2769
      %2865 = vst.msk [vmem:[%s491 + $0x10] sm:$0xff] %vm2862, %v2771
      %2866 = vst.msk [vmem:[%s491 + $0x18] sm:$0xff] %vm2862, %v2773
      %2867 = vst.msk [vmem:[%s491 + $0x20] sm:$0xff] %vm2862, %v2775
      %2868 = vst.msk [vmem:[%s491 + $0x28] sm:$0xff] %vm2862, %v2777
      %2869 = vst.msk [vmem:[%s491 + $0x30] sm:$0xff] %vm2862, %v2779
      %2870 = vst.msk [vmem:[%s491 + $0x38] sm:$0xff] %vm2862, %v2781
      %2871 = vst.msk [vmem:[%s491 + $0x40] sm:$0xff] %vm2862, %v2783
      %2872 = vst.msk [vmem:[%s491 + $0x48] sm:$0xff] %vm2862, %v2785
      %2873 = vst.msk [vmem:[%s491 + $0x50] sm:$0xff] %vm2862, %v2787
      %2874 = vst.msk [vmem:[%s491 + $0x58] sm:$0xff] %vm2862, %v2789
      %2875 = vst.msk [vmem:[%s491 + $0x60] sm:$0xff] %vm2862, %v2791
      %2876 = vst.msk [vmem:[%s491 + $0x68] sm:$0xff] %vm2862, %v2793
      %2877 = vst.msk [vmem:[%s491 + $0x70] sm:$0xff] %vm2862, %v2795
      %2878 = vst.msk [vmem:[%s491 + $0x78] sm:$0xff] %vm2862, %v2797
      %2879 = vst.msk [vmem:[%s491 + $0x80] sm:$0xff] %vm2862, %v2799
      %2880 = vst.msk [vmem:[%s491 + $0x88] sm:$0xff] %vm2862, %v2801
      %2881 = vst.msk [vmem:[%s491 + $0x90] sm:$0xff] %vm2862, %v2803
      %2882 = vst.msk [vmem:[%s491 + $0x98] sm:$0xff] %vm2862, %v2805
      %2883 = vst.msk [vmem:[%s491 + $0xa0] sm:$0xff] %vm2862, %v2807
      %2884 = vst.msk [vmem:[%s491 + $0xa8] sm:$0xff] %vm2862, %v2809
      %2885 = vst.msk [vmem:[%s491 + $0xb0] sm:$0xff] %vm2862, %v2811
      %2886 = vst.msk [vmem:[%s491 + $0xb8] sm:$0xff] %vm2862, %v2813
      %2887 = vst.msk [vmem:[%s491 + $0xc0] sm:$0xff] %vm2862, %v2815
      %2888 = vst.msk [vmem:[%s491 + $0xc8] sm:$0xff] %vm2862, %v2817
      %2889 = vst.msk [vmem:[%s491 + $0xd0] sm:$0xff] %vm2862, %v2819
      %2890 = vst.msk [vmem:[%s491 + $0xd8] sm:$0xff] %vm2862, %v2821
      %2891 = vst.msk [vmem:[%s491 + $0xe0] sm:$0xff] %vm2862, %v2823
      %2892 = vst.msk [vmem:[%s491 + $0xe8] sm:$0xff] %vm2862, %v2825
      %2893 = vst.msk [vmem:[%s491 + $0xf0] sm:$0xff] %vm2862, %v2827
      %2894 = vst.msk [vmem:[%s491 + $0xf8] sm:$0xff] %vm2862, %v2829
      %2927 = vrot.lane.b32.xlu0 %v1457, 16
      %v2928 = vpop.permute.xlu0 %2927
      %2929 = vrot.lane.b32.xlu0 %v1459, 16
      %v2930 = vpop.permute.xlu0 %2929
      %2931 = vrot.lane.b32.xlu0 %v1461, 16
      %v2932 = vpop.permute.xlu0 %2931
      %2933 = vrot.lane.b32.xlu0 %v1463, 16
      %v2934 = vpop.permute.xlu0 %2933
      %2935 = vrot.lane.b32.xlu0 %v1465, 16
      %v2936 = vpop.permute.xlu0 %2935
      %2937 = vrot.lane.b32.xlu0 %v1467, 16
      %v2938 = vpop.permute.xlu0 %2937
      %2939 = vrot.lane.b32.xlu0 %v1469, 16
      %v2940 = vpop.permute.xlu0 %2939
      %2941 = vrot.lane.b32.xlu0 %v1471, 16
      %v2942 = vpop.permute.xlu0 %2941
      %2943 = vrot.lane.b32.xlu0 %v1473, 16
      %v2944 = vpop.permute.xlu0 %2943
      %2945 = vrot.lane.b32.xlu0 %v1475, 16
      %v2946 = vpop.permute.xlu0 %2945
      %2947 = vrot.lane.b32.xlu0 %v1477, 16
      %v2948 = vpop.permute.xlu0 %2947
      %2949 = vrot.lane.b32.xlu0 %v1479, 16
      %v2950 = vpop.permute.xlu0 %2949
      %2951 = vrot.lane.b32.xlu0 %v1481, 16
      %v2952 = vpop.permute.xlu0 %2951
      %2953 = vrot.lane.b32.xlu0 %v1483, 16
      %v2954 = vpop.permute.xlu0 %2953
      %2955 = vrot.lane.b32.xlu0 %v1485, 16
      %v2956 = vpop.permute.xlu0 %2955
      %2957 = vrot.lane.b32.xlu0 %v1487, 16
      %v2958 = vpop.permute.xlu0 %2957
      %2959 = vrot.lane.b32.xlu0 %v1489, 16
      %v2960 = vpop.permute.xlu0 %2959
      %2961 = vrot.lane.b32.xlu0 %v1491, 16
      %v2962 = vpop.permute.xlu0 %2961
      %2963 = vrot.lane.b32.xlu0 %v1493, 16
      %v2964 = vpop.permute.xlu0 %2963
      %2965 = vrot.lane.b32.xlu0 %v1495, 16
      %v2966 = vpop.permute.xlu0 %2965
      %2967 = vrot.lane.b32.xlu0 %v1497, 16
      %v2968 = vpop.permute.xlu0 %2967
      %2969 = vrot.lane.b32.xlu0 %v1499, 16
      %v2970 = vpop.permute.xlu0 %2969
      %2971 = vrot.lane.b32.xlu0 %v1501, 16
      %v2972 = vpop.permute.xlu0 %2971
      %2973 = vrot.lane.b32.xlu0 %v1503, 16
      %v2974 = vpop.permute.xlu0 %2973
      %2975 = vrot.lane.b32.xlu0 %v1505, 16
      %v2976 = vpop.permute.xlu0 %2975
      %2977 = vrot.lane.b32.xlu0 %v1507, 16
      %v2978 = vpop.permute.xlu0 %2977
      %2979 = vrot.lane.b32.xlu0 %v1509, 16
      %v2980 = vpop.permute.xlu0 %2979
      %2981 = vrot.lane.b32.xlu0 %v1511, 16
      %v2982 = vpop.permute.xlu0 %2981
      %2983 = vrot.lane.b32.xlu0 %v1513, 16
      %v2984 = vpop.permute.xlu0 %2983
      %2985 = vrot.lane.b32.xlu0 %v1515, 16
      %v2986 = vpop.permute.xlu0 %2985
      %2987 = vrot.lane.b32.xlu0 %v1517, 16
      %v2988 = vpop.permute.xlu0 %2987
      %2989 = vrot.lane.b32.xlu0 %v1519, 16
      %v2990 = vpop.permute.xlu0 %2989
      %vm3023 = vcmask 261312
      %3024 = vst.msk [vmem:[%s491] sm:$0xff] %vm3023, %v2928
      %3025 = vst.msk [vmem:[%s491 + $0x8] sm:$0xff] %vm3023, %v2930
      %3026 = vst.msk [vmem:[%s491 + $0x10] sm:$0xff] %vm3023, %v2932
      %3027 = vst.msk [vmem:[%s491 + $0x18] sm:$0xff] %vm3023, %v2934
      %3028 = vst.msk [vmem:[%s491 + $0x20] sm:$0xff] %vm3023, %v2936
      %3029 = vst.msk [vmem:[%s491 + $0x28] sm:$0xff] %vm3023, %v2938
      %3030 = vst.msk [vmem:[%s491 + $0x30] sm:$0xff] %vm3023, %v2940
      %3031 = vst.msk [vmem:[%s491 + $0x38] sm:$0xff] %vm3023, %v2942
      %3032 = vst.msk [vmem:[%s491 + $0x40] sm:$0xff] %vm3023, %v2944
      %3033 = vst.msk [vmem:[%s491 + $0x48] sm:$0xff] %vm3023, %v2946
      %3034 = vst.msk [vmem:[%s491 + $0x50] sm:$0xff] %vm3023, %v2948
      %3035 = vst.msk [vmem:[%s491 + $0x58] sm:$0xff] %vm3023, %v2950
      %3036 = vst.msk [vmem:[%s491 + $0x60] sm:$0xff] %vm3023, %v2952
      %3037 = vst.msk [vmem:[%s491 + $0x68] sm:$0xff] %vm3023, %v2954
      %3038 = vst.msk [vmem:[%s491 + $0x70] sm:$0xff] %vm3023, %v2956
      %3039 = vst.msk [vmem:[%s491 + $0x78] sm:$0xff] %vm3023, %v2958
      %3040 = vst.msk [vmem:[%s491 + $0x80] sm:$0xff] %vm3023, %v2960
      %3041 = vst.msk [vmem:[%s491 + $0x88] sm:$0xff] %vm3023, %v2962
      %3042 = vst.msk [vmem:[%s491 + $0x90] sm:$0xff] %vm3023, %v2964
      %3043 = vst.msk [vmem:[%s491 + $0x98] sm:$0xff] %vm3023, %v2966
      %3044 = vst.msk [vmem:[%s491 + $0xa0] sm:$0xff] %vm3023, %v2968
      %3045 = vst.msk [vmem:[%s491 + $0xa8] sm:$0xff] %vm3023, %v2970
      %3046 = vst.msk [vmem:[%s491 + $0xb0] sm:$0xff] %vm3023, %v2972
      %3047 = vst.msk [vmem:[%s491 + $0xb8] sm:$0xff] %vm3023, %v2974
      %3048 = vst.msk [vmem:[%s491 + $0xc0] sm:$0xff] %vm3023, %v2976
      %3049 = vst.msk [vmem:[%s491 + $0xc8] sm:$0xff] %vm3023, %v2978
      %3050 = vst.msk [vmem:[%s491 + $0xd0] sm:$0xff] %vm3023, %v2980
      %3051 = vst.msk [vmem:[%s491 + $0xd8] sm:$0xff] %vm3023, %v2982
      %3052 = vst.msk [vmem:[%s491 + $0xe0] sm:$0xff] %vm3023, %v2984
      %3053 = vst.msk [vmem:[%s491 + $0xe8] sm:$0xff] %vm3023, %v2986
      %3054 = vst.msk [vmem:[%s491 + $0xf0] sm:$0xff] %vm3023, %v2988
      %3055 = vst.msk [vmem:[%s491 + $0xf8] sm:$0xff] %vm3023, %v2990
      %s3056 = smul.u32 32, %s25
      %p3057 = scmp.lt.s32.totalorder %s3056, 63
      %s3058 = scalar_select %p3057, %s3056, 63
      %s3059 = smul.addr %s3058, 8
      %s3060 = scalar_lea.vmem %s14, %s3059
      // Predicated region
      $region77: #{vae_state_forward.1} parent=75 // pred_check
        %p3061 = pneg %p347
      $region78: #{vae_state_forward.1} parent=75 // pred_check_branch
        %3063 = sbr.rel (%p3061) target = $region80
      $region79: #{vae_state_forward.1} parent=75 // pred_region
        %s3064 = smul.u32 32, %s25
      $region80: #{vae_state_forward.1} parent=75 // pred_fallthru
        _
    $region76: #{vae_state_forward.1} parent=5 // pred_fallthru
      _
    %p3065 = scmp.le.s32.totalorder 2, %s20
    // Predicated region
    $region81: #{vae_state_forward.1} parent=5 // pred_check
      %p3066 = pneg %p3065
    $region82: #{vae_state_forward.1} parent=5 // pred_check_branch
      %3068 = sbr.rel (%p3066) target = $region84
    $region83: #{vae_state_forward.1} parent=5 // pred_region
      %s3069 = ssub.s32 %s20, 2
      // Predicated region
      $region85: #{vae_state_forward.1} parent=83 // pred_check
        %p3070 = pneg %p353
      $region86: #{vae_state_forward.1} parent=83 // pred_check_branch
        %3072 = sbr.rel (%p3070) target = $region88
      $region87: #{vae_state_forward.1} parent=83 // pred_region
        %s3073 = smul.u32 32, %s26
        %p3074 = scmp.lt.s32.totalorder %s3073, 63
        %s3075 = scalar_select %p3074, %s3073, 63
        %s3076 = smul.addr %s3075, 8
        %s3077 = scalar_lea.vmem %s14, %s3076
      $region88: #{vae_state_forward.1} parent=83 // pred_fallthru
        _
    $region84: #{vae_state_forward.1} parent=5 // pred_fallthru
      _
  $region6: #{vae_state_forward.1} parent=0 // loop_footer
    %s24 = sadd.s32 1, %s20
  $region7: #{vae_state_forward.1} parent=0 // loop_footer_branch
    %19 = sbr.rel target = $region3
  $region8: #{vae_state_forward.1} parent=0 // loop_exit
    _

</llo_original>
